<compile_context>
chip_gen: v6e
topology: v6e:2x2x1
jax: 0.10.0
libtpu: 0.0.40
codegen_flags: <defaults>
</compile_context>

<pallas_src>
import jax
import jax.numpy as jnp
from jax.experimental import pallas as pl
from jax.experimental.pallas import tpu as pltpu

BATCH = 32                        # hardcoded by the PyTorch module (x.view(batch_size, 300))
C_IN, L_IN = 44, 49               # conv input length 49 -> 24 conv steps -> GLU -> 12
C_OUT, K, STRIDE = 25, 3, 2
T_OUT = (L_IN - K) // STRIDE + 1  # 24
T_HALF = T_OUT // 2               # 12  (nn.GLU default dim=-1 splits the time axis)
FEAT = C_OUT * T_HALF             # 300
HID = 50
OUT = 2


# ----------------------------- fused Pallas kernel --------------------------------

def _elu(v):
    # exp(min(v,0)) - 1 instead of expm1 for guaranteed Mosaic lowering; f32 absolute
    # error vs expm1 is ~1e-7, far inside the 1e-4 check against the expm1 reference.
    return jnp.where(v > 0, v, jnp.exp(jnp.minimum(v, 0.0)) - 1.0)


def _encoder_kernel(pab_ref, wct_ref, bc_ref, w1s_ref, b1_ref, w2_ref, b2_ref, o_ref):
    # pab: (768, 132) im2col rows; rows [0,384) = GLU value half, [384,768) = gate half,
    #      both ordered row = t*32 + b.  wct: (132, 25), bc: (1, 25).
    y = jnp.dot(pab_ref[...], wct_ref[...], preferred_element_type=jnp.float32) + bc_ref[...]

    n = T_HALF * BATCH                              # 384 (tile-aligned row split)
    g = y[:n, :] * jax.nn.sigmoid(y[n:, :])         # GLU -> (384, 25), row = t*32 + b

    # Linear(300 -> 50): PyTorch flatten order j = o*12 + t is folded into w1s[t] (25,50),
    # so the contraction is sum over t of (32,25)@(25,50) on tile-aligned row blocks.
    acc = jnp.zeros((BATCH, HID), dtype=jnp.float32)
    for t in range(T_HALF):                         # 12 unrolled tiny dots
        acc = acc + jnp.dot(g[t * BATCH:(t + 1) * BATCH, :], w1s_ref[t],
                            preferred_element_type=jnp.float32)
    h = _elu(acc + b1_ref[...])                     # (32, 50)

    out = jnp.dot(h, w2_ref[...], preferred_element_type=jnp.float32) + b2_ref[...]
    o_ref[...] = _elu(out)                          # (32, 2)


_encoder_call = pl.pallas_call(
    _encoder_kernel,
    out_shape=jax.ShapeDtypeStruct((BATCH, OUT), jnp.float32),
    in_specs=[pl.BlockSpec(memory_space=pltpu.MemorySpace.VMEM) for _ in range(7)],
    out_specs=pl.BlockSpec(memory_space=pltpu.MemorySpace.VMEM),
)


# ----------------------------- parameter prep (run ONCE at init) ------------------

def prepare_params(params):
    """Hoist every parameter-only transform out of the per-call path."""
    wc, bc, w1, b1, w2, b2 = params
    # Conv weight -> (132, 25) with row f = k*44 + c (matches the im2col feature order).
    wct = jnp.transpose(wc, (2, 1, 0)).reshape(K * C_IN, C_OUT)
    # Linear-1 weight -> (12, 25, 50): w1s[t, o, h] = w1[h, o*12 + t]  (PyTorch view order).
    w1s = jnp.transpose(w1.reshape(HID, C_OUT, T_HALF), (2, 1, 0))
    return (wct, bc.reshape(1, C_OUT), w1s, b1.reshape(1, HID),
            w2.T, b2.reshape(1, OUT))


# ----------------------------- forward wrapper -------------------------------------

@jax.jit
def encoder_forward(x, prep):
    wct, bcr, w1s, b1r, w2t, b2r = prep
    # im2col with static strided slices only (no gather).  [l, b, c] layout so the
    # resulting rows are time-major: row = t_full*32 + b.
    xT = jnp.transpose(x, (2, 0, 1))                          # (49, 32, 44)
    cols = [xT[k:k + 2 * T_OUT - 1:2] for k in range(K)]      # 3 x (24, 32, 44)
    patches = jnp.concatenate(cols, axis=-1)                  # (24, 32, 132), f = k*44 + c
    pab = patches.reshape(T_OUT * BATCH, K * C_IN)            # (768, 132); rows [0,384)=value, [384,768)=gate
    return _encoder_call(pab, wct, bcr, w1s, b1r, w2t, b2r)


# ----------------------------- pure-JAX reference ----------------------------------

def reference(x, params):
    wc, bc, w1, b1, w2, b2 = params
    y = jax.lax.conv_general_dilated(
        x, wc, window_strides=(STRIDE,), padding="VALID",
        dimension_numbers=("NCH", "OIH", "NCH"))
    y = y + bc[None, :, None]                          # (B, 25, 24)
    a, gate = y[:, :, :T_HALF], y[:, :, T_HALF:]       # GLU over dim=-1
    g = a * jax.nn.sigmoid(gate)                       # (B, 25, 12)
    flat = g.reshape(x.shape[0], FEAT)                 # == x.view(batch, 300)
    h = flat @ w1.T + b1
    h = jnp.where(h > 0, h, jnp.expm1(h))
    o = h @ w2.T + b2
    return jnp.where(o > 0, o, jnp.expm1(o))


# ----------------------------- main -------------------------------------------------

if __name__ == "__main__":
    key = jax.random.PRNGKey(0)
    ks = jax.random.split(key, 7)

    def _uniform(k, shape, fan_in):
        bound = 1.0 / (fan_in ** 0.5)
        return jax.random.uniform(k, shape, jnp.float32, -bound, bound)

    wc = _uniform(ks[0], (C_OUT, C_IN, K), C_IN * K)   # Conv1d weight
    bc = _uniform(ks[1], (C_OUT,), C_IN * K)           # Conv1d bias
    w1 = _uniform(ks[2], (HID, FEAT), FEAT)            # Linear(300, 50)
    b1 = _uniform(ks[3], (HID,), FEAT)
    w2 = _uniform(ks[4], (OUT, HID), HID)              # Linear(50, 2)
    b2 = _uniform(ks[5], (OUT,), HID)
    params = (wc, bc, w1, b1, w2, b2)

    prep = jax.block_until_ready(prepare_params(params))   # one-time, not in the hot path

    x = jax.random.normal(ks[6], (BATCH, C_IN, L_IN), jnp.float32)

    out = jax.block_until_ready(encoder_forward(x, prep))
    ref = jax.block_until_ready(reference(x, params))

    assert out.shape == (BATCH, OUT), out.shape
    if not jnp.allclose(out, ref, rtol=1e-4, atol=1e-4):
        raise AssertionError(f"mismatch: max abs err {jnp.max(jnp.abs(out - ref))}")

    print("KERNEL_OK")
</pallas_src>

<mosaic_0001>
module attributes {stable_mosaic.version = 11 : i64} {
  func.func @_encoder_kernel(%arg0: memref<768x132xf32, #tpu.memory_space<vmem>>, %arg1: memref<132x25xf32, #tpu.memory_space<vmem>>, %arg2: memref<1x25xf32, #tpu.memory_space<vmem>>, %arg3: memref<12x25x50xf32, #tpu.memory_space<vmem>>, %arg4: memref<1x50xf32, #tpu.memory_space<vmem>>, %arg5: memref<50x2xf32, #tpu.memory_space<vmem>>, %arg6: memref<1x2xf32, #tpu.memory_space<vmem>>, %arg7: memref<32x2xf32, #tpu.memory_space<vmem>>) attributes {dimension_semantics = [], scalar_prefetch = 0 : i64, scratch_operands = 0 : i64, tpu.core_type = #tpu.core_type<tc>} {
    %c0 = arith.constant 0 : index
    %c0_0 = arith.constant 0 : index
    %0 = vector.load %arg0[%c0, %c0_0] : memref<768x132xf32, #tpu.memory_space<vmem>>, vector<768x132xf32>
    %c0_1 = arith.constant 0 : index
    %c0_2 = arith.constant 0 : index
    %1 = vector.load %arg1[%c0_1, %c0_2] : memref<132x25xf32, #tpu.memory_space<vmem>>, vector<132x25xf32>
    %cst = arith.constant dense<0.000000e+00> : vector<768x25xf32>
    %2 = tpu.matmul %0, %1, %cst {dimension_numbers = #tpu.dot_dimension_numbers<[1], [0], [0], [1], [0, 0, 1, 1], [], []>} : vector<768x132xf32>, vector<132x25xf32>, vector<768x25xf32> -> vector<768x25xf32>
    %c0_3 = arith.constant 0 : index
    %c0_4 = arith.constant 0 : index
    %3 = vector.load %arg2[%c0_3, %c0_4] : memref<1x25xf32, #tpu.memory_space<vmem>>, vector<1x25xf32>
    %4 = vector.broadcast %3 : vector<1x25xf32> to vector<768x25xf32>
    %5 = arith.addf %2, %4 : vector<768x25xf32>
    %6 = vector.extract_strided_slice %5 {offsets = [0, 0], sizes = [384, 25], strides = [1, 1]} : vector<768x25xf32> to vector<384x25xf32>
    %7 = vector.extract_strided_slice %5 {offsets = [384, 0], sizes = [384, 25], strides = [1, 1]} : vector<768x25xf32> to vector<384x25xf32>
    %8 = arith.negf %7 : vector<384x25xf32>
    %9 = math.exp %8 : vector<384x25xf32>
    %cst_5 = arith.constant 1.000000e+00 : f32
    %10 = vector.broadcast %cst_5 : f32 to vector<384x25xf32>
    %11 = arith.addf %10, %9 : vector<384x25xf32>
    %12 = arith.divf %10, %11 : vector<384x25xf32>
    %13 = arith.mulf %6, %12 : vector<384x25xf32>
    %cst_6 = arith.constant 0.000000e+00 : f32
    %14 = vector.broadcast %cst_6 : f32 to vector<32x50xf32>
    %15 = vector.extract_strided_slice %13 {offsets = [0, 0], sizes = [32, 25], strides = [1, 1]} : vector<384x25xf32> to vector<32x25xf32>
    %c0_7 = arith.constant 0 : index
    %c0_8 = arith.constant 0 : index
    %c0_9 = arith.constant 0 : index
    %16 = vector.load %arg3[%c0_7, %c0_8, %c0_9] : memref<12x25x50xf32, #tpu.memory_space<vmem>>, vector<1x25x50xf32>
    %17 = vector.shape_cast %16 : vector<1x25x50xf32> to vector<25x50xf32>
    %cst_10 = arith.constant dense<0.000000e+00> : vector<32x50xf32>
    %18 = tpu.matmul %15, %17, %cst_10 {dimension_numbers = #tpu.dot_dimension_numbers<[1], [0], [0], [1], [0, 0, 1, 1], [], []>} : vector<32x25xf32>, vector<25x50xf32>, vector<32x50xf32> -> vector<32x50xf32>
    %19 = arith.addf %14, %18 : vector<32x50xf32>
    %20 = vector.extract_strided_slice %13 {offsets = [32, 0], sizes = [32, 25], strides = [1, 1]} : vector<384x25xf32> to vector<32x25xf32>
    %c1 = arith.constant 1 : index
    %c0_11 = arith.constant 0 : index
    %c0_12 = arith.constant 0 : index
    %21 = vector.load %arg3[%c1, %c0_11, %c0_12] : memref<12x25x50xf32, #tpu.memory_space<vmem>>, vector<1x25x50xf32>
    %22 = vector.shape_cast %21 : vector<1x25x50xf32> to vector<25x50xf32>
    %cst_13 = arith.constant dense<0.000000e+00> : vector<32x50xf32>
    %23 = tpu.matmul %20, %22, %cst_13 {dimension_numbers = #tpu.dot_dimension_numbers<[1], [0], [0], [1], [0, 0, 1, 1], [], []>} : vector<32x25xf32>, vector<25x50xf32>, vector<32x50xf32> -> vector<32x50xf32>
    %24 = arith.addf %19, %23 : vector<32x50xf32>
    %25 = vector.extract_strided_slice %13 {offsets = [64, 0], sizes = [32, 25], strides = [1, 1]} : vector<384x25xf32> to vector<32x25xf32>
    %c2 = arith.constant 2 : index
    %c0_14 = arith.constant 0 : index
    %c0_15 = arith.constant 0 : index
    %26 = vector.load %arg3[%c2, %c0_14, %c0_15] : memref<12x25x50xf32, #tpu.memory_space<vmem>>, vector<1x25x50xf32>
    %27 = vector.shape_cast %26 : vector<1x25x50xf32> to vector<25x50xf32>
    %cst_16 = arith.constant dense<0.000000e+00> : vector<32x50xf32>
    %28 = tpu.matmul %25, %27, %cst_16 {dimension_numbers = #tpu.dot_dimension_numbers<[1], [0], [0], [1], [0, 0, 1, 1], [], []>} : vector<32x25xf32>, vector<25x50xf32>, vector<32x50xf32> -> vector<32x50xf32>
    %29 = arith.addf %24, %28 : vector<32x50xf32>
    %30 = vector.extract_strided_slice %13 {offsets = [96, 0], sizes = [32, 25], strides = [1, 1]} : vector<384x25xf32> to vector<32x25xf32>
    %c3 = arith.constant 3 : index
    %c0_17 = arith.constant 0 : index
    %c0_18 = arith.constant 0 : index
    %31 = vector.load %arg3[%c3, %c0_17, %c0_18] : memref<12x25x50xf32, #tpu.memory_space<vmem>>, vector<1x25x50xf32>
    %32 = vector.shape_cast %31 : vector<1x25x50xf32> to vector<25x50xf32>
    %cst_19 = arith.constant dense<0.000000e+00> : vector<32x50xf32>
    %33 = tpu.matmul %30, %32, %cst_19 {dimension_numbers = #tpu.dot_dimension_numbers<[1], [0], [0], [1], [0, 0, 1, 1], [], []>} : vector<32x25xf32>, vector<25x50xf32>, vector<32x50xf32> -> vector<32x50xf32>
    %34 = arith.addf %29, %33 : vector<32x50xf32>
    %35 = vector.extract_strided_slice %13 {offsets = [128, 0], sizes = [32, 25], strides = [1, 1]} : vector<384x25xf32> to vector<32x25xf32>
    %c4 = arith.constant 4 : index
    %c0_20 = arith.constant 0 : index
    %c0_21 = arith.constant 0 : index
    %36 = vector.load %arg3[%c4, %c0_20, %c0_21] : memref<12x25x50xf32, #tpu.memory_space<vmem>>, vector<1x25x50xf32>
    %37 = vector.shape_cast %36 : vector<1x25x50xf32> to vector<25x50xf32>
    %cst_22 = arith.constant dense<0.000000e+00> : vector<32x50xf32>
    %38 = tpu.matmul %35, %37, %cst_22 {dimension_numbers = #tpu.dot_dimension_numbers<[1], [0], [0], [1], [0, 0, 1, 1], [], []>} : vector<32x25xf32>, vector<25x50xf32>, vector<32x50xf32> -> vector<32x50xf32>
    %39 = arith.addf %34, %38 : vector<32x50xf32>
    %40 = vector.extract_strided_slice %13 {offsets = [160, 0], sizes = [32, 25], strides = [1, 1]} : vector<384x25xf32> to vector<32x25xf32>
    %c5 = arith.constant 5 : index
    %c0_23 = arith.constant 0 : index
    %c0_24 = arith.constant 0 : index
    %41 = vector.load %arg3[%c5, %c0_23, %c0_24] : memref<12x25x50xf32, #tpu.memory_space<vmem>>, vector<1x25x50xf32>
    %42 = vector.shape_cast %41 : vector<1x25x50xf32> to vector<25x50xf32>
    %cst_25 = arith.constant dense<0.000000e+00> : vector<32x50xf32>
    %43 = tpu.matmul %40, %42, %cst_25 {dimension_numbers = #tpu.dot_dimension_numbers<[1], [0], [0], [1], [0, 0, 1, 1], [], []>} : vector<32x25xf32>, vector<25x50xf32>, vector<32x50xf32> -> vector<32x50xf32>
    %44 = arith.addf %39, %43 : vector<32x50xf32>
    %45 = vector.extract_strided_slice %13 {offsets = [192, 0], sizes = [32, 25], strides = [1, 1]} : vector<384x25xf32> to vector<32x25xf32>
    %c6 = arith.constant 6 : index
    %c0_26 = arith.constant 0 : index
    %c0_27 = arith.constant 0 : index
    %46 = vector.load %arg3[%c6, %c0_26, %c0_27] : memref<12x25x50xf32, #tpu.memory_space<vmem>>, vector<1x25x50xf32>
    %47 = vector.shape_cast %46 : vector<1x25x50xf32> to vector<25x50xf32>
    %cst_28 = arith.constant dense<0.000000e+00> : vector<32x50xf32>
    %48 = tpu.matmul %45, %47, %cst_28 {dimension_numbers = #tpu.dot_dimension_numbers<[1], [0], [0], [1], [0, 0, 1, 1], [], []>} : vector<32x25xf32>, vector<25x50xf32>, vector<32x50xf32> -> vector<32x50xf32>
    %49 = arith.addf %44, %48 : vector<32x50xf32>
    %50 = vector.extract_strided_slice %13 {offsets = [224, 0], sizes = [32, 25], strides = [1, 1]} : vector<384x25xf32> to vector<32x25xf32>
    %c7 = arith.constant 7 : index
    %c0_29 = arith.constant 0 : index
    %c0_30 = arith.constant 0 : index
    %51 = vector.load %arg3[%c7, %c0_29, %c0_30] : memref<12x25x50xf32, #tpu.memory_space<vmem>>, vector<1x25x50xf32>
    %52 = vector.shape_cast %51 : vector<1x25x50xf32> to vector<25x50xf32>
    %cst_31 = arith.constant dense<0.000000e+00> : vector<32x50xf32>
    %53 = tpu.matmul %50, %52, %cst_31 {dimension_numbers = #tpu.dot_dimension_numbers<[1], [0], [0], [1], [0, 0, 1, 1], [], []>} : vector<32x25xf32>, vector<25x50xf32>, vector<32x50xf32> -> vector<32x50xf32>
    %54 = arith.addf %49, %53 : vector<32x50xf32>
    %55 = vector.extract_strided_slice %13 {offsets = [256, 0], sizes = [32, 25], strides = [1, 1]} : vector<384x25xf32> to vector<32x25xf32>
    %c8 = arith.constant 8 : index
    %c0_32 = arith.constant 0 : index
    %c0_33 = arith.constant 0 : index
    %56 = vector.load %arg3[%c8, %c0_32, %c0_33] : memref<12x25x50xf32, #tpu.memory_space<vmem>>, vector<1x25x50xf32>
    %57 = vector.shape_cast %56 : vector<1x25x50xf32> to vector<25x50xf32>
    %cst_34 = arith.constant dense<0.000000e+00> : vector<32x50xf32>
    %58 = tpu.matmul %55, %57, %cst_34 {dimension_numbers = #tpu.dot_dimension_numbers<[1], [0], [0], [1], [0, 0, 1, 1], [], []>} : vector<32x25xf32>, vector<25x50xf32>, vector<32x50xf32> -> vector<32x50xf32>
    %59 = arith.addf %54, %58 : vector<32x50xf32>
    %60 = vector.extract_strided_slice %13 {offsets = [288, 0], sizes = [32, 25], strides = [1, 1]} : vector<384x25xf32> to vector<32x25xf32>
    %c9 = arith.constant 9 : index
    %c0_35 = arith.constant 0 : index
    %c0_36 = arith.constant 0 : index
    %61 = vector.load %arg3[%c9, %c0_35, %c0_36] : memref<12x25x50xf32, #tpu.memory_space<vmem>>, vector<1x25x50xf32>
    %62 = vector.shape_cast %61 : vector<1x25x50xf32> to vector<25x50xf32>
    %cst_37 = arith.constant dense<0.000000e+00> : vector<32x50xf32>
    %63 = tpu.matmul %60, %62, %cst_37 {dimension_numbers = #tpu.dot_dimension_numbers<[1], [0], [0], [1], [0, 0, 1, 1], [], []>} : vector<32x25xf32>, vector<25x50xf32>, vector<32x50xf32> -> vector<32x50xf32>
    %64 = arith.addf %59, %63 : vector<32x50xf32>
    %65 = vector.extract_strided_slice %13 {offsets = [320, 0], sizes = [32, 25], strides = [1, 1]} : vector<384x25xf32> to vector<32x25xf32>
    %c10 = arith.constant 10 : index
    %c0_38 = arith.constant 0 : index
    %c0_39 = arith.constant 0 : index
    %66 = vector.load %arg3[%c10, %c0_38, %c0_39] : memref<12x25x50xf32, #tpu.memory_space<vmem>>, vector<1x25x50xf32>
    %67 = vector.shape_cast %66 : vector<1x25x50xf32> to vector<25x50xf32>
    %cst_40 = arith.constant dense<0.000000e+00> : vector<32x50xf32>
    %68 = tpu.matmul %65, %67, %cst_40 {dimension_numbers = #tpu.dot_dimension_numbers<[1], [0], [0], [1], [0, 0, 1, 1], [], []>} : vector<32x25xf32>, vector<25x50xf32>, vector<32x50xf32> -> vector<32x50xf32>
    %69 = arith.addf %64, %68 : vector<32x50xf32>
    %70 = vector.extract_strided_slice %13 {offsets = [352, 0], sizes = [32, 25], strides = [1, 1]} : vector<384x25xf32> to vector<32x25xf32>
    %c11 = arith.constant 11 : index
    %c0_41 = arith.constant 0 : index
    %c0_42 = arith.constant 0 : index
    %71 = vector.load %arg3[%c11, %c0_41, %c0_42] : memref<12x25x50xf32, #tpu.memory_space<vmem>>, vector<1x25x50xf32>
    %72 = vector.shape_cast %71 : vector<1x25x50xf32> to vector<25x50xf32>
    %cst_43 = arith.constant dense<0.000000e+00> : vector<32x50xf32>
    %73 = tpu.matmul %70, %72, %cst_43 {dimension_numbers = #tpu.dot_dimension_numbers<[1], [0], [0], [1], [0, 0, 1, 1], [], []>} : vector<32x25xf32>, vector<25x50xf32>, vector<32x50xf32> -> vector<32x50xf32>
    %74 = arith.addf %69, %73 : vector<32x50xf32>
    %c0_44 = arith.constant 0 : index
    %c0_45 = arith.constant 0 : index
    %75 = vector.load %arg4[%c0_44, %c0_45] : memref<1x50xf32, #tpu.memory_space<vmem>>, vector<1x50xf32>
    %76 = vector.broadcast %75 : vector<1x50xf32> to vector<32x50xf32>
    %77 = arith.addf %74, %76 : vector<32x50xf32>
    %cst_46 = arith.constant 0.000000e+00 : f32
    %78 = vector.broadcast %cst_46 : f32 to vector<32x50xf32>
    %79 = arith.cmpf ogt, %77, %78 : vector<32x50xf32>
    %cst_47 = arith.constant 0.000000e+00 : f32
    %80 = vector.broadcast %cst_47 : f32 to vector<32x50xf32>
    %81 = arith.minimumf %77, %80 : vector<32x50xf32>
    %82 = math.exp %81 : vector<32x50xf32>
    %cst_48 = arith.constant 1.000000e+00 : f32
    %83 = vector.broadcast %cst_48 : f32 to vector<32x50xf32>
    %84 = arith.subf %82, %83 : vector<32x50xf32>
    %85 = arith.select %79, %77, %84 : vector<32x50xi1>, vector<32x50xf32>
    %c0_49 = arith.constant 0 : index
    %c0_50 = arith.constant 0 : index
    %86 = vector.load %arg5[%c0_49, %c0_50] : memref<50x2xf32, #tpu.memory_space<vmem>>, vector<50x2xf32>
    %cst_51 = arith.constant dense<0.000000e+00> : vector<32x2xf32>
    %87 = tpu.matmul %85, %86, %cst_51 {dimension_numbers = #tpu.dot_dimension_numbers<[1], [0], [0], [1], [0, 0, 1, 1], [], []>} : vector<32x50xf32>, vector<50x2xf32>, vector<32x2xf32> -> vector<32x2xf32>
    %c0_52 = arith.constant 0 : index
    %c0_53 = arith.constant 0 : index
    %88 = vector.load %arg6[%c0_52, %c0_53] : memref<1x2xf32, #tpu.memory_space<vmem>>, vector<1x2xf32>
    %89 = vector.broadcast %88 : vector<1x2xf32> to vector<32x2xf32>
    %90 = arith.addf %87, %89 : vector<32x2xf32>
    %cst_54 = arith.constant 0.000000e+00 : f32
    %91 = vector.broadcast %cst_54 : f32 to vector<32x2xf32>
    %92 = arith.cmpf ogt, %90, %91 : vector<32x2xf32>
    %cst_55 = arith.constant 0.000000e+00 : f32
    %93 = vector.broadcast %cst_55 : f32 to vector<32x2xf32>
    %94 = arith.minimumf %90, %93 : vector<32x2xf32>
    %95 = math.exp %94 : vector<32x2xf32>
    %cst_56 = arith.constant 1.000000e+00 : f32
    %96 = vector.broadcast %cst_56 : f32 to vector<32x2xf32>
    %97 = arith.subf %95, %96 : vector<32x2xf32>
    %98 = arith.select %92, %90, %97 : vector<32x2xi1>, vector<32x2xf32>
    %c0_57 = arith.constant 0 : index
    %c0_58 = arith.constant 0 : index
    %99 = vector.load %arg7[%c0_57, %c0_58] : memref<32x2xf32, #tpu.memory_space<vmem>>, vector<32x2xf32>
    tpu.vector_store %arg7[%c0_57, %c0_58], %98 {strides = array<i32>} : memref<32x2xf32, #tpu.memory_space<vmem>>, vector<32x2xf32>,
    return
  }
}

</mosaic_0001>

<llo_original>
// kernel: encoder_forward.1
$region0: #{encoder_forward.1}
  #allocation0 [shape = 'u32[]', space=smem, size = 0x4, offset = 0x4, fixed_abs, tag = 'smem constant byte address 0x4 - core index']
  #allocation1 [shape = 'u32[144,128]{1,0:T(1,128)}', space=vmem, size = 0x12000, scoped, tag = 'internal scratch']
  %s0 = inlined_call_operand.vmem [shape: f32[768,132], index: 0, kind: input, shape index: {}]
  %s1 = inlined_call_operand.vmem [shape: f32[132,25], index: 1, kind: input, shape index: {}]
  %s2 = inlined_call_operand.vmem [shape: f32[1,25], index: 2, kind: input, shape index: {}]
  %s3 = inlined_call_operand.vmem [shape: f32[12,25,50], index: 3, kind: input, shape index: {}]
  %s4 = inlined_call_operand.vmem [shape: f32[1,50], index: 4, kind: input, shape index: {}]
  %s5 = inlined_call_operand.vmem [shape: f32[50,2], index: 5, kind: input, shape index: {}]
  %s6 = inlined_call_operand.vmem [shape: f32[1,2], index: 6, kind: input, shape index: {}]
  %s7 = inlined_call_operand.vmem [shape: f32[32,2], index: 7, kind: output, shape index: {}]
  %s8 = sld [smem:[#allocation0]]
  $region38: #{encoder_forward.1} parent=0
    _
  %s10 = ssub.s32 1, %s8
  %s11 = scalar_select 0, %s10, %s8
  // Predicated region
  $region2: #{encoder_forward.1} parent=0 // pred_check
    _
  $region3: #{encoder_forward.1} parent=0 // pred_check_branch
    %13 = sbr.rel (0) target = $region5
  $region4: #{encoder_forward.1} parent=0 // pred_region
    _
  $region5: #{encoder_forward.1} parent=0 // pred_fallthru
    _
  // Predicated region
  $region6: #{encoder_forward.1} parent=0 // pred_check
    _
  $region7: #{encoder_forward.1} parent=0 // pred_check_branch
    %15 = sbr.rel (0) target = $region9
  $region8: #{encoder_forward.1} parent=0 // pred_region
    _
  $region9: #{encoder_forward.1} parent=0 // pred_fallthru
    _
  // Predicated region
  $region10: #{encoder_forward.1} parent=0 // pred_check
    _
  $region11: #{encoder_forward.1} parent=0 // pred_check_branch
    %17 = sbr.rel (0) target = $region13
  $region12: #{encoder_forward.1} parent=0 // pred_region
    _
  $region13: #{encoder_forward.1} parent=0 // pred_fallthru
    _
  // Predicated region
  $region14: #{encoder_forward.1} parent=0 // pred_check
    _
  $region15: #{encoder_forward.1} parent=0 // pred_check_branch
    %19 = sbr.rel (0) target = $region17
  $region16: #{encoder_forward.1} parent=0 // pred_region
    _
  $region17: #{encoder_forward.1} parent=0 // pred_fallthru
    _
  // Predicated region
  $region18: #{encoder_forward.1} parent=0 // pred_check
    _
  $region19: #{encoder_forward.1} parent=0 // pred_check_branch
    %21 = sbr.rel (0) target = $region21
  $region20: #{encoder_forward.1} parent=0 // pred_region
    _
  $region21: #{encoder_forward.1} parent=0 // pred_fallthru
    _
  // Predicated region
  $region22: #{encoder_forward.1} parent=0 // pred_check
    _
  $region23: #{encoder_forward.1} parent=0 // pred_check_branch
    %23 = sbr.rel (0) target = $region25
  $region24: #{encoder_forward.1} parent=0 // pred_region
    _
  $region25: #{encoder_forward.1} parent=0 // pred_fallthru
    _
  // Predicated region
  $region26: #{encoder_forward.1} parent=0 // pred_check
    _
  $region27: #{encoder_forward.1} parent=0 // pred_check_branch
    %25 = sbr.rel (0) target = $region29
  $region28: #{encoder_forward.1} parent=0 // pred_region
    _
  $region29: #{encoder_forward.1} parent=0 // pred_fallthru
    _
  %v26 = vld [vmem:[%s0] sm:$0xff]
  %v27 = vld [vmem:[%s0 + $0x8] sm:$0xff]
  %v28 = vld [vmem:[%s0 + $0x10] sm:$0xff]
  %v29 = vld [vmem:[%s0 + $0x18] sm:$0xff]
  %v30 = vld [vmem:[%s0 + $0x20] sm:$0xff]
  %v31 = vld [vmem:[%s0 + $0x28] sm:$0xff]
  %v32 = vld [vmem:[%s0 + $0x30] sm:$0xff]
  %v33 = vld [vmem:[%s0 + $0x38] sm:$0xff]
  %v34 = vld [vmem:[%s0 + $0x40] sm:$0xff]
  %v35 = vld [vmem:[%s0 + $0x48] sm:$0xff]
  %v36 = vld [vmem:[%s0 + $0x50] sm:$0xff]
  %v37 = vld [vmem:[%s0 + $0x58] sm:$0xff]
  %v38 = vld [vmem:[%s0 + $0x60] sm:$0xff]
  %v39 = vld [vmem:[%s0 + $0x68] sm:$0xff]
  %v40 = vld [vmem:[%s0 + $0x70] sm:$0xff]
  %v41 = vld [vmem:[%s0 + $0x78] sm:$0xff]
  %v42 = vld [vmem:[%s0 + $0x80] sm:$0xff]
  %v43 = vld [vmem:[%s0 + $0x88] sm:$0xff]
  %v44 = vld [vmem:[%s0 + $0x90] sm:$0xff]
  %v45 = vld [vmem:[%s0 + $0x98] sm:$0xff]
  %v46 = vld [vmem:[%s0 + $0xa0] sm:$0xff]
  %v47 = vld [vmem:[%s0 + $0xa8] sm:$0xff]
  %v48 = vld [vmem:[%s0 + $0xb0] sm:$0xff]
  %v49 = vld [vmem:[%s0 + $0xb8] sm:$0xff]
  %v50 = vld [vmem:[%s0 + $0xc0] sm:$0xff]
  %v51 = vld [vmem:[%s0 + $0xc8] sm:$0xff]
  %v52 = vld [vmem:[%s0 + $0xd0] sm:$0xff]
  %v53 = vld [vmem:[%s0 + $0xd8] sm:$0xff]
  %v54 = vld [vmem:[%s0 + $0xe0] sm:$0xff]
  %v55 = vld [vmem:[%s0 + $0xe8] sm:$0xff]
  %v56 = vld [vmem:[%s0 + $0xf0] sm:$0xff]
  %v57 = vld [vmem:[%s0 + $0xf8] sm:$0xff]
  %v58 = vld [vmem:[%s0 + $0x100] sm:$0xff]
  %v59 = vld [vmem:[%s0 + $0x108] sm:$0xff]
  %v60 = vld [vmem:[%s0 + $0x110] sm:$0xff]
  %v61 = vld [vmem:[%s0 + $0x118] sm:$0xff]
  %v62 = vld [vmem:[%s0 + $0x120] sm:$0xff]
  %v63 = vld [vmem:[%s0 + $0x128] sm:$0xff]
  %v64 = vld [vmem:[%s0 + $0x130] sm:$0xff]
  %v65 = vld [vmem:[%s0 + $0x138] sm:$0xff]
  %v66 = vld [vmem:[%s0 + $0x140] sm:$0xff]
  %v67 = vld [vmem:[%s0 + $0x148] sm:$0xff]
  %v68 = vld [vmem:[%s0 + $0x150] sm:$0xff]
  %v69 = vld [vmem:[%s0 + $0x158] sm:$0xff]
  %v70 = vld [vmem:[%s0 + $0x160] sm:$0xff]
  %v71 = vld [vmem:[%s0 + $0x168] sm:$0xff]
  %v72 = vld [vmem:[%s0 + $0x170] sm:$0xff]
  %v73 = vld [vmem:[%s0 + $0x178] sm:$0xff]
  %v74 = vld [vmem:[%s0 + $0x180] sm:$0xff]
  %v75 = vld [vmem:[%s0 + $0x188] sm:$0xff]
  %v76 = vld [vmem:[%s0 + $0x190] sm:$0xff]
  %v77 = vld [vmem:[%s0 + $0x198] sm:$0xff]
  %v78 = vld [vmem:[%s0 + $0x1a0] sm:$0xff]
  %v79 = vld [vmem:[%s0 + $0x1a8] sm:$0xff]
  %v80 = vld [vmem:[%s0 + $0x1b0] sm:$0xff]
  %v81 = vld [vmem:[%s0 + $0x1b8] sm:$0xff]
  %v82 = vld [vmem:[%s0 + $0x1c0] sm:$0xff]
  %v83 = vld [vmem:[%s0 + $0x1c8] sm:$0xff]
  %v84 = vld [vmem:[%s0 + $0x1d0] sm:$0xff]
  %v85 = vld [vmem:[%s0 + $0x1d8] sm:$0xff]
  %v86 = vld [vmem:[%s0 + $0x1e0] sm:$0xff]
  %v87 = vld [vmem:[%s0 + $0x1e8] sm:$0xff]
  %v88 = vld [vmem:[%s0 + $0x1f0] sm:$0xff]
  %v89 = vld [vmem:[%s0 + $0x1f8] sm:$0xff]
  %v90 = vld [vmem:[%s0 + $0x200] sm:$0xff]
  %v91 = vld [vmem:[%s0 + $0x208] sm:$0xff]
  %v92 = vld [vmem:[%s0 + $0x210] sm:$0xff]
  %v93 = vld [vmem:[%s0 + $0x218] sm:$0xff]
  %v94 = vld [vmem:[%s0 + $0x220] sm:$0xff]
  %v95 = vld [vmem:[%s0 + $0x228] sm:$0xff]
  %v96 = vld [vmem:[%s0 + $0x230] sm:$0xff]
  %v97 = vld [vmem:[%s0 + $0x238] sm:$0xff]
  %v98 = vld [vmem:[%s0 + $0x240] sm:$0xff]
  %v99 = vld [vmem:[%s0 + $0x248] sm:$0xff]
  %v100 = vld [vmem:[%s0 + $0x250] sm:$0xff]
  %v101 = vld [vmem:[%s0 + $0x258] sm:$0xff]
  %v102 = vld [vmem:[%s0 + $0x260] sm:$0xff]
  %v103 = vld [vmem:[%s0 + $0x268] sm:$0xff]
  %v104 = vld [vmem:[%s0 + $0x270] sm:$0xff]
  %v105 = vld [vmem:[%s0 + $0x278] sm:$0xff]
  %v106 = vld [vmem:[%s0 + $0x280] sm:$0xff]
  %v107 = vld [vmem:[%s0 + $0x288] sm:$0xff]
  %v108 = vld [vmem:[%s0 + $0x290] sm:$0xff]
  %v109 = vld [vmem:[%s0 + $0x298] sm:$0xff]
  %v110 = vld [vmem:[%s0 + $0x2a0] sm:$0xff]
  %v111 = vld [vmem:[%s0 + $0x2a8] sm:$0xff]
  %v112 = vld [vmem:[%s0 + $0x2b0] sm:$0xff]
  %v113 = vld [vmem:[%s0 + $0x2b8] sm:$0xff]
  %v114 = vld [vmem:[%s0 + $0x2c0] sm:$0xff]
  %v115 = vld [vmem:[%s0 + $0x2c8] sm:$0xff]
  %v116 = vld [vmem:[%s0 + $0x2d0] sm:$0xff]
  %v117 = vld [vmem:[%s0 + $0x2d8] sm:$0xff]
  %v118 = vld [vmem:[%s0 + $0x2e0] sm:$0xff]
  %v119 = vld [vmem:[%s0 + $0x2e8] sm:$0xff]
  %v120 = vld [vmem:[%s0 + $0x2f0] sm:$0xff]
  %v121 = vld [vmem:[%s0 + $0x2f8] sm:$0xff]
  %v122 = vld [vmem:[%s0 + $0x300] sm:$0xff]
  %v123 = vld [vmem:[%s0 + $0x308] sm:$0xff]
  %v124 = vld [vmem:[%s0 + $0x310] sm:$0xff]
  %v125 = vld [vmem:[%s0 + $0x318] sm:$0xff]
  %v126 = vld [vmem:[%s0 + $0x320] sm:$0xff]
  %v127 = vld [vmem:[%s0 + $0x328] sm:$0xff]
  %v128 = vld [vmem:[%s0 + $0x330] sm:$0xff]
  %v129 = vld [vmem:[%s0 + $0x338] sm:$0xff]
  %v130 = vld [vmem:[%s0 + $0x340] sm:$0xff]
  %v131 = vld [vmem:[%s0 + $0x348] sm:$0xff]
  %v132 = vld [vmem:[%s0 + $0x350] sm:$0xff]
  %v133 = vld [vmem:[%s0 + $0x358] sm:$0xff]
  %v134 = vld [vmem:[%s0 + $0x360] sm:$0xff]
  %v135 = vld [vmem:[%s0 + $0x368] sm:$0xff]
  %v136 = vld [vmem:[%s0 + $0x370] sm:$0xff]
  %v137 = vld [vmem:[%s0 + $0x378] sm:$0xff]
  %v138 = vld [vmem:[%s0 + $0x380] sm:$0xff]
  %v139 = vld [vmem:[%s0 + $0x388] sm:$0xff]
  %v140 = vld [vmem:[%s0 + $0x390] sm:$0xff]
  %v141 = vld [vmem:[%s0 + $0x398] sm:$0xff]
  %v142 = vld [vmem:[%s0 + $0x3a0] sm:$0xff]
  %v143 = vld [vmem:[%s0 + $0x3a8] sm:$0xff]
  %v144 = vld [vmem:[%s0 + $0x3b0] sm:$0xff]
  %v145 = vld [vmem:[%s0 + $0x3b8] sm:$0xff]
  %v146 = vld [vmem:[%s0 + $0x3c0] sm:$0xff]
  %v147 = vld [vmem:[%s0 + $0x3c8] sm:$0xff]
  %v148 = vld [vmem:[%s0 + $0x3d0] sm:$0xff]
  %v149 = vld [vmem:[%s0 + $0x3d8] sm:$0xff]
  %v150 = vld [vmem:[%s0 + $0x3e0] sm:$0xff]
  %v151 = vld [vmem:[%s0 + $0x3e8] sm:$0xff]
  %v152 = vld [vmem:[%s0 + $0x3f0] sm:$0xff]
  %v153 = vld [vmem:[%s0 + $0x3f8] sm:$0xff]
  %v154 = vld [vmem:[%s0 + $0x400] sm:$0xff]
  %v155 = vld [vmem:[%s0 + $0x408] sm:$0xff]
  %v156 = vld [vmem:[%s0 + $0x410] sm:$0xff]
  %v157 = vld [vmem:[%s0 + $0x418] sm:$0xff]
  %v158 = vld [vmem:[%s0 + $0x420] sm:$0xff]
  %v159 = vld [vmem:[%s0 + $0x428] sm:$0xff]
  %v160 = vld [vmem:[%s0 + $0x430] sm:$0xff]
  %v161 = vld [vmem:[%s0 + $0x438] sm:$0xff]
  %v162 = vld [vmem:[%s0 + $0x440] sm:$0xff]
  %v163 = vld [vmem:[%s0 + $0x448] sm:$0xff]
  %v164 = vld [vmem:[%s0 + $0x450] sm:$0xff]
  %v165 = vld [vmem:[%s0 + $0x458] sm:$0xff]
  %v166 = vld [vmem:[%s0 + $0x460] sm:$0xff]
  %v167 = vld [vmem:[%s0 + $0x468] sm:$0xff]
  %v168 = vld [vmem:[%s0 + $0x470] sm:$0xff]
  %v169 = vld [vmem:[%s0 + $0x478] sm:$0xff]
  %v170 = vld [vmem:[%s0 + $0x480] sm:$0xff]
  %v171 = vld [vmem:[%s0 + $0x488] sm:$0xff]
  %v172 = vld [vmem:[%s0 + $0x490] sm:$0xff]
  %v173 = vld [vmem:[%s0 + $0x498] sm:$0xff]
  %v174 = vld [vmem:[%s0 + $0x4a0] sm:$0xff]
  %v175 = vld [vmem:[%s0 + $0x4a8] sm:$0xff]
  %v176 = vld [vmem:[%s0 + $0x4b0] sm:$0xff]
  %v177 = vld [vmem:[%s0 + $0x4b8] sm:$0xff]
  %v178 = vld [vmem:[%s0 + $0x4c0] sm:$0xff]
  %v179 = vld [vmem:[%s0 + $0x4c8] sm:$0xff]
  %v180 = vld [vmem:[%s0 + $0x4d0] sm:$0xff]
  %v181 = vld [vmem:[%s0 + $0x4d8] sm:$0xff]
  %v182 = vld [vmem:[%s0 + $0x4e0] sm:$0xff]
  %v183 = vld [vmem:[%s0 + $0x4e8] sm:$0xff]
  %v184 = vld [vmem:[%s0 + $0x4f0] sm:$0xff]
  %v185 = vld [vmem:[%s0 + $0x4f8] sm:$0xff]
  %v186 = vld [vmem:[%s0 + $0x500] sm:$0xff]
  %v187 = vld [vmem:[%s0 + $0x508] sm:$0xff]
  %v188 = vld [vmem:[%s0 + $0x510] sm:$0xff]
  %v189 = vld [vmem:[%s0 + $0x518] sm:$0xff]
  %v190 = vld [vmem:[%s0 + $0x520] sm:$0xff]
  %v191 = vld [vmem:[%s0 + $0x528] sm:$0xff]
  %v192 = vld [vmem:[%s0 + $0x530] sm:$0xff]
  %v193 = vld [vmem:[%s0 + $0x538] sm:$0xff]
  %v194 = vld [vmem:[%s0 + $0x540] sm:$0xff]
  %v195 = vld [vmem:[%s0 + $0x548] sm:$0xff]
  %v196 = vld [vmem:[%s0 + $0x550] sm:$0xff]
  %v197 = vld [vmem:[%s0 + $0x558] sm:$0xff]
  %v198 = vld [vmem:[%s0 + $0x560] sm:$0xff]
  %v199 = vld [vmem:[%s0 + $0x568] sm:$0xff]
  %v200 = vld [vmem:[%s0 + $0x570] sm:$0xff]
  %v201 = vld [vmem:[%s0 + $0x578] sm:$0xff]
  %v202 = vld [vmem:[%s0 + $0x580] sm:$0xff]
  %v203 = vld [vmem:[%s0 + $0x588] sm:$0xff]
  %v204 = vld [vmem:[%s0 + $0x590] sm:$0xff]
  %v205 = vld [vmem:[%s0 + $0x598] sm:$0xff]
  %v206 = vld [vmem:[%s0 + $0x5a0] sm:$0xff]
  %v207 = vld [vmem:[%s0 + $0x5a8] sm:$0xff]
  %v208 = vld [vmem:[%s0 + $0x5b0] sm:$0xff]
  %v209 = vld [vmem:[%s0 + $0x5b8] sm:$0xff]
  %v210 = vld [vmem:[%s0 + $0x5c0] sm:$0xff]
  %v211 = vld [vmem:[%s0 + $0x5c8] sm:$0xff]
  %v212 = vld [vmem:[%s0 + $0x5d0] sm:$0xff]
  %v213 = vld [vmem:[%s0 + $0x5d8] sm:$0xff]
  %v214 = vld [vmem:[%s0 + $0x5e0] sm:$0xff]
  %v215 = vld [vmem:[%s0 + $0x5e8] sm:$0xff]
  %v216 = vld [vmem:[%s0 + $0x5f0] sm:$0xff]
  %v217 = vld [vmem:[%s0 + $0x5f8] sm:$0xff]
  %v218 = vld [vmem:[%s1] sm:$0xff]
  %v219 = vld [vmem:[%s1 + $0x8] sm:$0xff]
  %v220 = vld [vmem:[%s1 + $0x10] sm:$0xff]
  %v221 = vld [vmem:[%s1 + $0x18] sm:$0xff]
  %v222 = vld [vmem:[%s1 + $0x20] sm:$0xff]
  %v223 = vld [vmem:[%s1 + $0x28] sm:$0xff]
  %v224 = vld [vmem:[%s1 + $0x30] sm:$0xff]
  %v225 = vld [vmem:[%s1 + $0x38] sm:$0xff]
  %v226 = vld [vmem:[%s1 + $0x40] sm:$0xff]
  %v227 = vld [vmem:[%s1 + $0x48] sm:$0xff]
  %v228 = vld [vmem:[%s1 + $0x50] sm:$0xff]
  %v229 = vld [vmem:[%s1 + $0x58] sm:$0xff]
  %v230 = vld [vmem:[%s1 + $0x60] sm:$0xff]
  %v231 = vld [vmem:[%s1 + $0x68] sm:$0xff]
  %v232 = vld [vmem:[%s1 + $0x70] sm:$0xff]
  %v233 = vld [vmem:[%s1 + $0x78] sm:$0xff]
  %v234 = vld [vmem:[%s1 + $0x80] sm:$0xf]
  %v235 = vld [vmem:[%s2] sm:$0x1]
  %v237 = vlaneseq
  %v238 = vshrl.u32 %v237, 7
  %v239 = vsub.s32 0, %v238
  %v240 = vrot.slane %v235, %v239
  %vm242 = vcmask 31744
  %v244 = vsel %vm242, %v27, 0
  %v247 = vsel %vm242, %v29, 0
  %v250 = vsel %vm242, %v31, 0
  %v253 = vsel %vm242, %v33, 0
  %v256 = vsel %vm242, %v35, 0
  %v259 = vsel %vm242, %v37, 0
  %v262 = vsel %vm242, %v39, 0
  %v265 = vsel %vm242, %v41, 0
  %v268 = vsel %vm242, %v43, 0
  %v271 = vsel %vm242, %v45, 0
  %v274 = vsel %vm242, %v47, 0
  %v277 = vsel %vm242, %v49, 0
  %v280 = vsel %vm242, %v51, 0
  %v283 = vsel %vm242, %v53, 0
  %v286 = vsel %vm242, %v55, 0
  %v289 = vsel %vm242, %v57, 0
  %v292 = vsel %vm242, %v59, 0
  %v295 = vsel %vm242, %v61, 0
  %v298 = vsel %vm242, %v63, 0
  %v301 = vsel %vm242, %v65, 0
  %v304 = vsel %vm242, %v67, 0
  %v307 = vsel %vm242, %v69, 0
  %v310 = vsel %vm242, %v71, 0
  %v313 = vsel %vm242, %v73, 0
  %v316 = vsel %vm242, %v75, 0
  %v319 = vsel %vm242, %v77, 0
  %v322 = vsel %vm242, %v79, 0
  %v325 = vsel %vm242, %v81, 0
  %v328 = vsel %vm242, %v83, 0
  %v331 = vsel %vm242, %v85, 0
  %v334 = vsel %vm242, %v87, 0
  %v337 = vsel %vm242, %v89, 0
  %v340 = vsel %vm242, %v91, 0
  %v343 = vsel %vm242, %v93, 0
  %v346 = vsel %vm242, %v95, 0
  %v349 = vsel %vm242, %v97, 0
  %v352 = vsel %vm242, %v99, 0
  %v355 = vsel %vm242, %v101, 0
  %v358 = vsel %vm242, %v103, 0
  %v361 = vsel %vm242, %v105, 0
  %v364 = vsel %vm242, %v107, 0
  %v367 = vsel %vm242, %v109, 0
  %v370 = vsel %vm242, %v111, 0
  %v373 = vsel %vm242, %v113, 0
  %v376 = vsel %vm242, %v115, 0
  %v379 = vsel %vm242, %v117, 0
  %v382 = vsel %vm242, %v119, 0
  %v385 = vsel %vm242, %v121, 0
  %v388 = vsel %vm242, %v123, 0
  %v391 = vsel %vm242, %v125, 0
  %v394 = vsel %vm242, %v127, 0
  %v397 = vsel %vm242, %v129, 0
  %v400 = vsel %vm242, %v131, 0
  %v403 = vsel %vm242, %v133, 0
  %v406 = vsel %vm242, %v135, 0
  %v409 = vsel %vm242, %v137, 0
  %v412 = vsel %vm242, %v139, 0
  %v415 = vsel %vm242, %v141, 0
  %v418 = vsel %vm242, %v143, 0
  %v421 = vsel %vm242, %v145, 0
  %v424 = vsel %vm242, %v147, 0
  %v427 = vsel %vm242, %v149, 0
  %v430 = vsel %vm242, %v151, 0
  %v433 = vsel %vm242, %v153, 0
  %v436 = vsel %vm242, %v155, 0
  %v439 = vsel %vm242, %v157, 0
  %v442 = vsel %vm242, %v159, 0
  %v445 = vsel %vm242, %v161, 0
  %v448 = vsel %vm242, %v163, 0
  %v451 = vsel %vm242, %v165, 0
  %v454 = vsel %vm242, %v167, 0
  %v457 = vsel %vm242, %v169, 0
  %v460 = vsel %vm242, %v171, 0
  %v463 = vsel %vm242, %v173, 0
  %v466 = vsel %vm242, %v175, 0
  %v469 = vsel %vm242, %v177, 0
  %v472 = vsel %vm242, %v179, 0
  %v475 = vsel %vm242, %v181, 0
  %v478 = vsel %vm242, %v183, 0
  %v481 = vsel %vm242, %v185, 0
  %v484 = vsel %vm242, %v187, 0
  %v487 = vsel %vm242, %v189, 0
  %v490 = vsel %vm242, %v191, 0
  %v493 = vsel %vm242, %v193, 0
  %v496 = vsel %vm242, %v195, 0
  %v499 = vsel %vm242, %v197, 0
  %v502 = vsel %vm242, %v199, 0
  %v505 = vsel %vm242, %v201, 0
  %v508 = vsel %vm242, %v203, 0
  %v511 = vsel %vm242, %v205, 0
  %v514 = vsel %vm242, %v207, 0
  %v517 = vsel %vm242, %v209, 0
  %v520 = vsel %vm242, %v211, 0
  %v523 = vsel %vm242, %v213, 0
  %v526 = vsel %vm242, %v215, 0
  %v529 = vsel %vm242, %v217, 0
  %vm531 = vcmask 1043456
  %v533 = vsel %vm531, %v234, 0
  %535 = vmatprep.subr.mxu0 0.0
  %536 = vmatpush1.msra.mxu0 %v233
  %537 = vmatprep.subr.mxu0 0.0
  %538 = vmatpush1.msra.mxu0 %v232
  %539 = vmatprep.subr.mxu0 0.0
  %540 = vmatpush1.msra.mxu0 %v231
  %541 = vmatprep.subr.mxu0 0.0
  %542 = vmatpush1.msra.mxu0 %v230
  %543 = vmatprep.subr.mxu0 0.0
  %544 = vmatpush1.msra.mxu0 %v229
  %545 = vmatprep.subr.mxu0 0.0
  %546 = vmatpush1.msra.mxu0 %v228
  %547 = vmatprep.subr.mxu0 0.0
  %548 = vmatpush1.msra.mxu0 %v227
  %549 = vmatprep.subr.mxu0 0.0
  %550 = vmatpush1.msra.mxu0 %v226
  %551 = vmatprep.subr.mxu0 0.0
  %552 = vmatpush1.msra.mxu0 %v225
  %553 = vmatprep.subr.mxu0 0.0
  %554 = vmatpush1.msra.mxu0 %v224
  %555 = vmatprep.subr.mxu0 0.0
  %556 = vmatpush1.msra.mxu0 %v223
  %557 = vmatprep.subr.mxu0 0.0
  %558 = vmatpush1.msra.mxu0 %v222
  %559 = vmatprep.subr.mxu0 0.0
  %560 = vmatpush1.msra.mxu0 %v221
  %561 = vmatprep.subr.mxu0 0.0
  %562 = vmatpush1.msra.mxu0 %v220
  %563 = vmatprep.subr.mxu0 0.0
  %564 = vmatpush1.msra.mxu0 %v219
  %565 = vmatprep.subr.mxu0 0.0
  %566 = vmatpush1.msra.mxu0 %v218
  %567 = vmatprep.subr.mxu0 0.0
  %568 = vmatpush2.msra.mxu0 0.0
  %569 = vmatprep.subr.mxu0 0.0
  %570 = vmatpush2.msra.mxu0 0.0
  %571 = vmatprep.subr.mxu0 0.0
  %572 = vmatpush2.msra.mxu0 0.0
  %573 = vmatprep.subr.mxu0 0.0
  %574 = vmatpush2.msra.mxu0 0.0
  %575 = vmatprep.subr.mxu0 0.0
  %576 = vmatpush2.msra.mxu0 0.0
  %577 = vmatprep.subr.mxu0 0.0
  %578 = vmatpush2.msra.mxu0 0.0
  %579 = vmatprep.subr.mxu0 0.0
  %580 = vmatpush2.msra.mxu0 0.0
  %581 = vmatprep.subr.mxu0 0.0
  %582 = vmatpush2.msra.mxu0 0.0
  %583 = vmatprep.subr.mxu0 0.0
  %584 = vmatpush2.msra.mxu0 0.0
  %585 = vmatprep.subr.mxu0 0.0
  %586 = vmatpush2.msra.mxu0 0.0
  %587 = vmatprep.subr.mxu0 0.0
  %588 = vmatpush2.msra.mxu0 0.0
  %589 = vmatprep.subr.mxu0 0.0
  %590 = vmatpush2.msra.mxu0 0.0
  %591 = vmatprep.subr.mxu0 0.0
  %592 = vmatpush2.msra.mxu0 0.0
  %593 = vmatprep.subr.mxu0 0.0
  %594 = vmatpush2.msra.mxu0 0.0
  %595 = vmatprep.subr.mxu0 0.0
  %596 = vmatpush2.msra.mxu0 0.0
  %597 = vmatprep.subr.mxu0 0.0
  %598 = vmatpush2.msra.mxu0 %v533
  %599 = vmatprep.mubr.f32.mxu0 %v244
  %600 = vmatmul.mubr.f32.gmra.mxu0 %v26
  %v601 = vpop.f32.mrf.mxu0
  %v602 = vadd.f32 %v240, %v601
  %v603 = vpop.f32.mrf.mxu0
  %604 = vmatprep.mubr.f32.mxu0 %v247
  %605 = vmatmul.mubr.f32.gmra.mxu0 %v28
  %v606 = vpop.f32.mrf.mxu0
  %v607 = vadd.f32 %v240, %v606
  %v608 = vpop.f32.mrf.mxu0
  %609 = vmatprep.mubr.f32.mxu0 %v250
  %610 = vmatmul.mubr.f32.gmra.mxu0 %v30
  %v611 = vpop.f32.mrf.mxu0
  %v612 = vadd.f32 %v240, %v611
  %v613 = vpop.f32.mrf.mxu0
  %614 = vmatprep.mubr.f32.mxu0 %v253
  %615 = vmatmul.mubr.f32.gmra.mxu0 %v32
  %v616 = vpop.f32.mrf.mxu0
  %v617 = vadd.f32 %v240, %v616
  %v618 = vpop.f32.mrf.mxu0
  %619 = vmatprep.mubr.f32.mxu0 %v256
  %620 = vmatmul.mubr.f32.gmra.mxu0 %v34
  %v621 = vpop.f32.mrf.mxu0
  %v622 = vadd.f32 %v240, %v621
  %v623 = vpop.f32.mrf.mxu0
  %624 = vmatprep.mubr.f32.mxu0 %v259
  %625 = vmatmul.mubr.f32.gmra.mxu0 %v36
  %v626 = vpop.f32.mrf.mxu0
  %v627 = vadd.f32 %v240, %v626
  %v628 = vpop.f32.mrf.mxu0
  %629 = vmatprep.mubr.f32.mxu0 %v262
  %630 = vmatmul.mubr.f32.gmra.mxu0 %v38
  %v631 = vpop.f32.mrf.mxu0
  %v632 = vadd.f32 %v240, %v631
  %v633 = vpop.f32.mrf.mxu0
  %634 = vmatprep.mubr.f32.mxu0 %v265
  %635 = vmatmul.mubr.f32.gmra.mxu0 %v40
  %v636 = vpop.f32.mrf.mxu0
  %v637 = vadd.f32 %v240, %v636
  %v638 = vpop.f32.mrf.mxu0
  %639 = vmatprep.mubr.f32.mxu0 %v268
  %640 = vmatmul.mubr.f32.gmra.mxu0 %v42
  %v641 = vpop.f32.mrf.mxu0
  %v642 = vadd.f32 %v240, %v641
  %v643 = vpop.f32.mrf.mxu0
  %644 = vmatprep.mubr.f32.mxu0 %v271
  %645 = vmatmul.mubr.f32.gmra.mxu0 %v44
  %v646 = vpop.f32.mrf.mxu0
  %v647 = vadd.f32 %v240, %v646
  %v648 = vpop.f32.mrf.mxu0
  %649 = vmatprep.mubr.f32.mxu0 %v274
  %650 = vmatmul.mubr.f32.gmra.mxu0 %v46
  %v651 = vpop.f32.mrf.mxu0
  %v652 = vadd.f32 %v240, %v651
  %v653 = vpop.f32.mrf.mxu0
  %654 = vmatprep.mubr.f32.mxu0 %v277
  %655 = vmatmul.mubr.f32.gmra.mxu0 %v48
  %v656 = vpop.f32.mrf.mxu0
  %v657 = vadd.f32 %v240, %v656
  %v658 = vpop.f32.mrf.mxu0
  %659 = vmatprep.mubr.f32.mxu0 %v280
  %660 = vmatmul.mubr.f32.gmra.mxu0 %v50
  %v661 = vpop.f32.mrf.mxu0
  %v662 = vadd.f32 %v240, %v661
  %v663 = vpop.f32.mrf.mxu0
  %664 = vmatprep.mubr.f32.mxu0 %v283
  %665 = vmatmul.mubr.f32.gmra.mxu0 %v52
  %v666 = vpop.f32.mrf.mxu0
  %v667 = vadd.f32 %v240, %v666
  %v668 = vpop.f32.mrf.mxu0
  %669 = vmatprep.mubr.f32.mxu0 %v286
  %670 = vmatmul.mubr.f32.gmra.mxu0 %v54
  %v671 = vpop.f32.mrf.mxu0
  %v672 = vadd.f32 %v240, %v671
  %v673 = vpop.f32.mrf.mxu0
  %674 = vmatprep.mubr.f32.mxu0 %v289
  %675 = vmatmul.mubr.f32.gmra.mxu0 %v56
  %v676 = vpop.f32.mrf.mxu0
  %v677 = vadd.f32 %v240, %v676
  %v678 = vpop.f32.mrf.mxu0
  %679 = vmatprep.mubr.f32.mxu0 %v292
  %680 = vmatmul.mubr.f32.gmra.mxu0 %v58
  %v681 = vpop.f32.mrf.mxu0
  %v682 = vadd.f32 %v240, %v681
  %v683 = vpop.f32.mrf.mxu0
  %684 = vmatprep.mubr.f32.mxu0 %v295
  %685 = vmatmul.mubr.f32.gmra.mxu0 %v60
  %v686 = vpop.f32.mrf.mxu0
  %v687 = vadd.f32 %v240, %v686
  %v688 = vpop.f32.mrf.mxu0
  %689 = vmatprep.mubr.f32.mxu0 %v298
  %690 = vmatmul.mubr.f32.gmra.mxu0 %v62
  %v691 = vpop.f32.mrf.mxu0
  %v692 = vadd.f32 %v240, %v691
  %v693 = vpop.f32.mrf.mxu0
  %694 = vmatprep.mubr.f32.mxu0 %v301
  %695 = vmatmul.mubr.f32.gmra.mxu0 %v64
  %v696 = vpop.f32.mrf.mxu0
  %v697 = vadd.f32 %v240, %v696
  %v698 = vpop.f32.mrf.mxu0
  %699 = vmatprep.mubr.f32.mxu0 %v304
  %700 = vmatmul.mubr.f32.gmra.mxu0 %v66
  %v701 = vpop.f32.mrf.mxu0
  %v702 = vadd.f32 %v240, %v701
  %v703 = vpop.f32.mrf.mxu0
  %704 = vmatprep.mubr.f32.mxu0 %v307
  %705 = vmatmul.mubr.f32.gmra.mxu0 %v68
  %v706 = vpop.f32.mrf.mxu0
  %v707 = vadd.f32 %v240, %v706
  %v708 = vpop.f32.mrf.mxu0
  %709 = vmatprep.mubr.f32.mxu0 %v310
  %710 = vmatmul.mubr.f32.gmra.mxu0 %v70
  %v711 = vpop.f32.mrf.mxu0
  %v712 = vadd.f32 %v240, %v711
  %v713 = vpop.f32.mrf.mxu0
  %714 = vmatprep.mubr.f32.mxu0 %v313
  %715 = vmatmul.mubr.f32.gmra.mxu0 %v72
  %v716 = vpop.f32.mrf.mxu0
  %v717 = vadd.f32 %v240, %v716
  %v718 = vpop.f32.mrf.mxu0
  %719 = vmatprep.mubr.f32.mxu0 %v316
  %720 = vmatmul.mubr.f32.gmra.mxu0 %v74
  %v721 = vpop.f32.mrf.mxu0
  %v722 = vadd.f32 %v240, %v721
  %v723 = vpop.f32.mrf.mxu0
  %724 = vmatprep.mubr.f32.mxu0 %v319
  %725 = vmatmul.mubr.f32.gmra.mxu0 %v76
  %v726 = vpop.f32.mrf.mxu0
  %v727 = vadd.f32 %v240, %v726
  %v728 = vpop.f32.mrf.mxu0
  %729 = vmatprep.mubr.f32.mxu0 %v322
  %730 = vmatmul.mubr.f32.gmra.mxu0 %v78
  %v731 = vpop.f32.mrf.mxu0
  %v732 = vadd.f32 %v240, %v731
  %v733 = vpop.f32.mrf.mxu0
  %734 = vmatprep.mubr.f32.mxu0 %v325
  %735 = vmatmul.mubr.f32.gmra.mxu0 %v80
  %v736 = vpop.f32.mrf.mxu0
  %v737 = vadd.f32 %v240, %v736
  %v738 = vpop.f32.mrf.mxu0
  %739 = vmatprep.mubr.f32.mxu0 %v328
  %740 = vmatmul.mubr.f32.gmra.mxu0 %v82
  %v741 = vpop.f32.mrf.mxu0
  %v742 = vadd.f32 %v240, %v741
  %v743 = vpop.f32.mrf.mxu0
  %744 = vmatprep.mubr.f32.mxu0 %v331
  %745 = vmatmul.mubr.f32.gmra.mxu0 %v84
  %v746 = vpop.f32.mrf.mxu0
  %v747 = vadd.f32 %v240, %v746
  %v748 = vpop.f32.mrf.mxu0
  %749 = vmatprep.mubr.f32.mxu0 %v334
  %750 = vmatmul.mubr.f32.gmra.mxu0 %v86
  %v751 = vpop.f32.mrf.mxu0
  %v752 = vadd.f32 %v240, %v751
  %v753 = vpop.f32.mrf.mxu0
  %754 = vmatprep.mubr.f32.mxu0 %v337
  %755 = vmatmul.mubr.f32.gmra.mxu0 %v88
  %v756 = vpop.f32.mrf.mxu0
  %v757 = vadd.f32 %v240, %v756
  %v758 = vpop.f32.mrf.mxu0
  %759 = vmatprep.mubr.f32.mxu0 %v340
  %760 = vmatmul.mubr.f32.gmra.mxu0 %v90
  %v761 = vpop.f32.mrf.mxu0
  %v762 = vadd.f32 %v240, %v761
  %v763 = vpop.f32.mrf.mxu0
  %764 = vmatprep.mubr.f32.mxu0 %v343
  %765 = vmatmul.mubr.f32.gmra.mxu0 %v92
  %v766 = vpop.f32.mrf.mxu0
  %v767 = vadd.f32 %v240, %v766
  %v768 = vpop.f32.mrf.mxu0
  %769 = vmatprep.mubr.f32.mxu0 %v346
  %770 = vmatmul.mubr.f32.gmra.mxu0 %v94
  %v771 = vpop.f32.mrf.mxu0
  %v772 = vadd.f32 %v240, %v771
  %v773 = vpop.f32.mrf.mxu0
  %774 = vmatprep.mubr.f32.mxu0 %v349
  %775 = vmatmul.mubr.f32.gmra.mxu0 %v96
  %v776 = vpop.f32.mrf.mxu0
  %v777 = vadd.f32 %v240, %v776
  %v778 = vpop.f32.mrf.mxu0
  %779 = vmatprep.mubr.f32.mxu0 %v352
  %780 = vmatmul.mubr.f32.gmra.mxu0 %v98
  %v781 = vpop.f32.mrf.mxu0
  %v782 = vadd.f32 %v240, %v781
  %v783 = vpop.f32.mrf.mxu0
  %784 = vmatprep.mubr.f32.mxu0 %v355
  %785 = vmatmul.mubr.f32.gmra.mxu0 %v100
  %v786 = vpop.f32.mrf.mxu0
  %v787 = vadd.f32 %v240, %v786
  %v788 = vpop.f32.mrf.mxu0
  %789 = vmatprep.mubr.f32.mxu0 %v358
  %790 = vmatmul.mubr.f32.gmra.mxu0 %v102
  %v791 = vpop.f32.mrf.mxu0
  %v792 = vadd.f32 %v240, %v791
  %v793 = vpop.f32.mrf.mxu0
  %794 = vmatprep.mubr.f32.mxu0 %v361
  %795 = vmatmul.mubr.f32.gmra.mxu0 %v104
  %v796 = vpop.f32.mrf.mxu0
  %v797 = vadd.f32 %v240, %v796
  %v798 = vpop.f32.mrf.mxu0
  %799 = vmatprep.mubr.f32.mxu0 %v364
  %800 = vmatmul.mubr.f32.gmra.mxu0 %v106
  %v801 = vpop.f32.mrf.mxu0
  %v802 = vadd.f32 %v240, %v801
  %v803 = vpop.f32.mrf.mxu0
  %804 = vmatprep.mubr.f32.mxu0 %v367
  %805 = vmatmul.mubr.f32.gmra.mxu0 %v108
  %v806 = vpop.f32.mrf.mxu0
  %v807 = vadd.f32 %v240, %v806
  %v808 = vpop.f32.mrf.mxu0
  %809 = vmatprep.mubr.f32.mxu0 %v370
  %810 = vmatmul.mubr.f32.gmra.mxu0 %v110
  %v811 = vpop.f32.mrf.mxu0
  %v812 = vadd.f32 %v240, %v811
  %v813 = vpop.f32.mrf.mxu0
  %814 = vmatprep.mubr.f32.mxu0 %v373
  %815 = vmatmul.mubr.f32.gmra.mxu0 %v112
  %v816 = vpop.f32.mrf.mxu0
  %v817 = vadd.f32 %v240, %v816
  %v818 = vpop.f32.mrf.mxu0
  %819 = vmatprep.mubr.f32.mxu0 %v376
  %820 = vmatmul.mubr.f32.gmra.mxu0 %v114
  %v821 = vpop.f32.mrf.mxu0
  %v822 = vadd.f32 %v240, %v821
  %v823 = vpop.f32.mrf.mxu0
  %824 = vmatprep.mubr.f32.mxu0 %v379
  %825 = vmatmul.mubr.f32.gmra.mxu0 %v116
  %v826 = vpop.f32.mrf.mxu0
  %v827 = vadd.f32 %v240, %v826
  %v828 = vpop.f32.mrf.mxu0
  %829 = vmatprep.mubr.f32.mxu0 %v382
  %830 = vmatmul.mubr.f32.gmra.mxu0 %v118
  %v831 = vpop.f32.mrf.mxu0
  %v832 = vadd.f32 %v240, %v831
  %v833 = vpop.f32.mrf.mxu0
  %834 = vmatprep.mubr.f32.mxu0 %v385
  %835 = vmatmul.mubr.f32.gmra.mxu0 %v120
  %v836 = vpop.f32.mrf.mxu0
  %v837 = vadd.f32 %v240, %v836
  %v838 = vpop.f32.mrf.mxu0
  %839 = vmatprep.mubr.f32.mxu0 %v388
  %840 = vmatmul.mubr.f32.gmra.mxu0 %v122
  %v841 = vpop.f32.mrf.mxu0
  %v842 = vadd.f32 %v240, %v841
  %v843 = vpop.f32.mrf.mxu0
  %844 = vmatprep.mubr.f32.mxu0 %v391
  %845 = vmatmul.mubr.f32.gmra.mxu0 %v124
  %v846 = vpop.f32.mrf.mxu0
  %v847 = vadd.f32 %v240, %v846
  %v848 = vpop.f32.mrf.mxu0
  %849 = vmatprep.mubr.f32.mxu0 %v394
  %850 = vmatmul.mubr.f32.gmra.mxu0 %v126
  %v851 = vpop.f32.mrf.mxu0
  %v852 = vadd.f32 %v240, %v851
  %v853 = vpop.f32.mrf.mxu0
  %854 = vmatprep.mubr.f32.mxu0 %v397
  %855 = vmatmul.mubr.f32.gmra.mxu0 %v128
  %v856 = vpop.f32.mrf.mxu0
  %v857 = vadd.f32 %v240, %v856
  %v858 = vpop.f32.mrf.mxu0
  %859 = vmatprep.mubr.f32.mxu0 %v400
  %860 = vmatmul.mubr.f32.gmra.mxu0 %v130
  %v861 = vpop.f32.mrf.mxu0
  %v862 = vadd.f32 %v240, %v861
  %v863 = vpop.f32.mrf.mxu0
  %864 = vmatprep.mubr.f32.mxu0 %v403
  %865 = vmatmul.mubr.f32.gmra.mxu0 %v132
  %v866 = vpop.f32.mrf.mxu0
  %v867 = vadd.f32 %v240, %v866
  %v868 = vpop.f32.mrf.mxu0
  %869 = vmatprep.mubr.f32.mxu0 %v406
  %870 = vmatmul.mubr.f32.gmra.mxu0 %v134
  %v871 = vpop.f32.mrf.mxu0
  %v872 = vadd.f32 %v240, %v871
  %v873 = vpop.f32.mrf.mxu0
  %874 = vmatprep.mubr.f32.mxu0 %v409
  %875 = vmatmul.mubr.f32.gmra.mxu0 %v136
  %v876 = vpop.f32.mrf.mxu0
  %v877 = vadd.f32 %v240, %v876
  %v878 = vpop.f32.mrf.mxu0
  %879 = vmatprep.mubr.f32.mxu0 %v412
  %880 = vmatmul.mubr.f32.gmra.mxu0 %v138
  %v881 = vpop.f32.mrf.mxu0
  %v882 = vadd.f32 %v240, %v881
  %v883 = vpop.f32.mrf.mxu0
  %884 = vmatprep.mubr.f32.mxu0 %v415
  %885 = vmatmul.mubr.f32.gmra.mxu0 %v140
  %v886 = vpop.f32.mrf.mxu0
  %v887 = vadd.f32 %v240, %v886
  %v888 = vpop.f32.mrf.mxu0
  %889 = vmatprep.mubr.f32.mxu0 %v418
  %890 = vmatmul.mubr.f32.gmra.mxu0 %v142
  %v891 = vpop.f32.mrf.mxu0
  %v892 = vadd.f32 %v240, %v891
  %v893 = vpop.f32.mrf.mxu0
  %894 = vmatprep.mubr.f32.mxu0 %v421
  %895 = vmatmul.mubr.f32.gmra.mxu0 %v144
  %v896 = vpop.f32.mrf.mxu0
  %v897 = vadd.f32 %v240, %v896
  %v898 = vpop.f32.mrf.mxu0
  %899 = vmatprep.mubr.f32.mxu0 %v424
  %900 = vmatmul.mubr.f32.gmra.mxu0 %v146
  %v901 = vpop.f32.mrf.mxu0
  %v902 = vadd.f32 %v240, %v901
  %v903 = vpop.f32.mrf.mxu0
  %904 = vmatprep.mubr.f32.mxu0 %v427
  %905 = vmatmul.mubr.f32.gmra.mxu0 %v148
  %v906 = vpop.f32.mrf.mxu0
  %v907 = vadd.f32 %v240, %v906
  %v908 = vpop.f32.mrf.mxu0
  %909 = vmatprep.mubr.f32.mxu0 %v430
  %910 = vmatmul.mubr.f32.gmra.mxu0 %v150
  %v911 = vpop.f32.mrf.mxu0
  %v912 = vadd.f32 %v240, %v911
  %v913 = vpop.f32.mrf.mxu0
  %914 = vmatprep.mubr.f32.mxu0 %v433
  %915 = vmatmul.mubr.f32.gmra.mxu0 %v152
  %v916 = vpop.f32.mrf.mxu0
  %v917 = vadd.f32 %v240, %v916
  %v918 = vpop.f32.mrf.mxu0
  %919 = vmatprep.mubr.f32.mxu0 %v436
  %920 = vmatmul.mubr.f32.gmra.mxu0 %v154
  %v921 = vpop.f32.mrf.mxu0
  %v922 = vadd.f32 %v240, %v921
  %v923 = vpop.f32.mrf.mxu0
  %924 = vmatprep.mubr.f32.mxu0 %v439
  %925 = vmatmul.mubr.f32.gmra.mxu0 %v156
  %v926 = vpop.f32.mrf.mxu0
  %v927 = vadd.f32 %v240, %v926
  %v928 = vpop.f32.mrf.mxu0
  %929 = vmatprep.mubr.f32.mxu0 %v442
  %930 = vmatmul.mubr.f32.gmra.mxu0 %v158
  %v931 = vpop.f32.mrf.mxu0
  %v932 = vadd.f32 %v240, %v931
  %v933 = vpop.f32.mrf.mxu0
  %934 = vmatprep.mubr.f32.mxu0 %v445
  %935 = vmatmul.mubr.f32.gmra.mxu0 %v160
  %v936 = vpop.f32.mrf.mxu0
  %v937 = vadd.f32 %v240, %v936
  %v938 = vpop.f32.mrf.mxu0
  %939 = vmatprep.mubr.f32.mxu0 %v448
  %940 = vmatmul.mubr.f32.gmra.mxu0 %v162
  %v941 = vpop.f32.mrf.mxu0
  %v942 = vadd.f32 %v240, %v941
  %v943 = vpop.f32.mrf.mxu0
  %944 = vmatprep.mubr.f32.mxu0 %v451
  %945 = vmatmul.mubr.f32.gmra.mxu0 %v164
  %v946 = vpop.f32.mrf.mxu0
  %v947 = vadd.f32 %v240, %v946
  %v948 = vpop.f32.mrf.mxu0
  %949 = vmatprep.mubr.f32.mxu0 %v454
  %950 = vmatmul.mubr.f32.gmra.mxu0 %v166
  %v951 = vpop.f32.mrf.mxu0
  %v952 = vadd.f32 %v240, %v951
  %v953 = vpop.f32.mrf.mxu0
  %954 = vmatprep.mubr.f32.mxu0 %v457
  %955 = vmatmul.mubr.f32.gmra.mxu0 %v168
  %v956 = vpop.f32.mrf.mxu0
  %v957 = vadd.f32 %v240, %v956
  %v958 = vpop.f32.mrf.mxu0
  %959 = vmatprep.mubr.f32.mxu0 %v460
  %960 = vmatmul.mubr.f32.gmra.mxu0 %v170
  %v961 = vpop.f32.mrf.mxu0
  %v962 = vadd.f32 %v240, %v961
  %v963 = vpop.f32.mrf.mxu0
  %964 = vmatprep.mubr.f32.mxu0 %v463
  %965 = vmatmul.mubr.f32.gmra.mxu0 %v172
  %v966 = vpop.f32.mrf.mxu0
  %v967 = vadd.f32 %v240, %v966
  %v968 = vpop.f32.mrf.mxu0
  %969 = vmatprep.mubr.f32.mxu0 %v466
  %970 = vmatmul.mubr.f32.gmra.mxu0 %v174
  %v971 = vpop.f32.mrf.mxu0
  %v972 = vadd.f32 %v240, %v971
  %v973 = vpop.f32.mrf.mxu0
  %974 = vmatprep.mubr.f32.mxu0 %v469
  %975 = vmatmul.mubr.f32.gmra.mxu0 %v176
  %v976 = vpop.f32.mrf.mxu0
  %v977 = vadd.f32 %v240, %v976
  %v978 = vpop.f32.mrf.mxu0
  %979 = vmatprep.mubr.f32.mxu0 %v472
  %980 = vmatmul.mubr.f32.gmra.mxu0 %v178
  %v981 = vpop.f32.mrf.mxu0
  %v982 = vadd.f32 %v240, %v981
  %v983 = vpop.f32.mrf.mxu0
  %984 = vmatprep.mubr.f32.mxu0 %v475
  %985 = vmatmul.mubr.f32.gmra.mxu0 %v180
  %v986 = vpop.f32.mrf.mxu0
  %v987 = vadd.f32 %v240, %v986
  %v988 = vpop.f32.mrf.mxu0
  %989 = vmatprep.mubr.f32.mxu0 %v478
  %990 = vmatmul.mubr.f32.gmra.mxu0 %v182
  %v991 = vpop.f32.mrf.mxu0
  %v992 = vadd.f32 %v240, %v991
  %v993 = vpop.f32.mrf.mxu0
  %994 = vmatprep.mubr.f32.mxu0 %v481
  %995 = vmatmul.mubr.f32.gmra.mxu0 %v184
  %v996 = vpop.f32.mrf.mxu0
  %v997 = vadd.f32 %v240, %v996
  %v998 = vpop.f32.mrf.mxu0
  %999 = vmatprep.mubr.f32.mxu0 %v484
  %1000 = vmatmul.mubr.f32.gmra.mxu0 %v186
  %v1001 = vpop.f32.mrf.mxu0
  %v1002 = vadd.f32 %v240, %v1001
  %v1003 = vpop.f32.mrf.mxu0
  %1004 = vmatprep.mubr.f32.mxu0 %v487
  %1005 = vmatmul.mubr.f32.gmra.mxu0 %v188
  %v1006 = vpop.f32.mrf.mxu0
  %v1007 = vadd.f32 %v240, %v1006
  %v1008 = vpop.f32.mrf.mxu0
  %1009 = vmatprep.mubr.f32.mxu0 %v490
  %1010 = vmatmul.mubr.f32.gmra.mxu0 %v190
  %v1011 = vpop.f32.mrf.mxu0
  %v1012 = vadd.f32 %v240, %v1011
  %v1013 = vpop.f32.mrf.mxu0
  %1014 = vmatprep.mubr.f32.mxu0 %v493
  %1015 = vmatmul.mubr.f32.gmra.mxu0 %v192
  %v1016 = vpop.f32.mrf.mxu0
  %v1017 = vadd.f32 %v240, %v1016
  %v1018 = vpop.f32.mrf.mxu0
  %1019 = vmatprep.mubr.f32.mxu0 %v496
  %1020 = vmatmul.mubr.f32.gmra.mxu0 %v194
  %v1021 = vpop.f32.mrf.mxu0
  %v1022 = vadd.f32 %v240, %v1021
  %v1023 = vpop.f32.mrf.mxu0
  %1024 = vmatprep.mubr.f32.mxu0 %v499
  %1025 = vmatmul.mubr.f32.gmra.mxu0 %v196
  %v1026 = vpop.f32.mrf.mxu0
  %v1027 = vadd.f32 %v240, %v1026
  %v1028 = vpop.f32.mrf.mxu0
  %1029 = vmatprep.mubr.f32.mxu0 %v502
  %1030 = vmatmul.mubr.f32.gmra.mxu0 %v198
  %v1031 = vpop.f32.mrf.mxu0
  %v1032 = vadd.f32 %v240, %v1031
  %v1033 = vpop.f32.mrf.mxu0
  %1034 = vmatprep.mubr.f32.mxu0 %v505
  %1035 = vmatmul.mubr.f32.gmra.mxu0 %v200
  %v1036 = vpop.f32.mrf.mxu0
  %v1037 = vadd.f32 %v240, %v1036
  %v1038 = vpop.f32.mrf.mxu0
  %1039 = vmatprep.mubr.f32.mxu0 %v508
  %1040 = vmatmul.mubr.f32.gmra.mxu0 %v202
  %v1041 = vpop.f32.mrf.mxu0
  %v1042 = vadd.f32 %v240, %v1041
  %v1043 = vpop.f32.mrf.mxu0
  %1044 = vmatprep.mubr.f32.mxu0 %v511
  %1045 = vmatmul.mubr.f32.gmra.mxu0 %v204
  %v1046 = vpop.f32.mrf.mxu0
  %v1047 = vadd.f32 %v240, %v1046
  %v1048 = vpop.f32.mrf.mxu0
  %1049 = vmatprep.mubr.f32.mxu0 %v514
  %1050 = vmatmul.mubr.f32.gmra.mxu0 %v206
  %v1051 = vpop.f32.mrf.mxu0
  %v1052 = vadd.f32 %v240, %v1051
  %v1053 = vpop.f32.mrf.mxu0
  %1054 = vmatprep.mubr.f32.mxu0 %v517
  %1055 = vmatmul.mubr.f32.gmra.mxu0 %v208
  %v1056 = vpop.f32.mrf.mxu0
  %v1057 = vadd.f32 %v240, %v1056
  %v1058 = vpop.f32.mrf.mxu0
  %1059 = vmatprep.mubr.f32.mxu0 %v520
  %1060 = vmatmul.mubr.f32.gmra.mxu0 %v210
  %v1061 = vpop.f32.mrf.mxu0
  %v1062 = vadd.f32 %v240, %v1061
  %v1063 = vpop.f32.mrf.mxu0
  %1064 = vmatprep.mubr.f32.mxu0 %v523
  %1065 = vmatmul.mubr.f32.gmra.mxu0 %v212
  %v1066 = vpop.f32.mrf.mxu0
  %v1067 = vadd.f32 %v240, %v1066
  %v1068 = vpop.f32.mrf.mxu0
  %1069 = vmatprep.mubr.f32.mxu0 %v526
  %1070 = vmatmul.mubr.f32.gmra.mxu0 %v214
  %v1071 = vpop.f32.mrf.mxu0
  %v1072 = vadd.f32 %v240, %v1071
  %v1073 = vpop.f32.mrf.mxu0
  %1074 = vmatprep.mubr.f32.mxu0 %v529
  %1075 = vmatmul.mubr.f32.gmra.mxu0 %v216
  %v1076 = vpop.f32.mrf.mxu0
  %v1077 = vadd.f32 %v240, %v1076
  %v1078 = vpop.f32.mrf.mxu0
  %1079 = vdwg.mxu0
  %v1080 = vxor.u32 %v842, 2147483648
  %v1081 = vxor.u32 %v847, 2147483648
  %v1082 = vxor.u32 %v852, 2147483648
  %v1083 = vxor.u32 %v857, 2147483648
  %v1084 = vxor.u32 %v862, 2147483648
  %v1085 = vxor.u32 %v867, 2147483648
  %v1086 = vxor.u32 %v872, 2147483648
  %v1087 = vxor.u32 %v877, 2147483648
  %v1088 = vxor.u32 %v882, 2147483648
  %v1089 = vxor.u32 %v887, 2147483648
  %v1090 = vxor.u32 %v892, 2147483648
  %v1091 = vxor.u32 %v897, 2147483648
  %v1092 = vxor.u32 %v902, 2147483648
  %v1093 = vxor.u32 %v907, 2147483648
  %v1094 = vxor.u32 %v912, 2147483648
  %v1095 = vxor.u32 %v917, 2147483648
  %v1096 = vxor.u32 %v922, 2147483648
  %v1097 = vxor.u32 %v927, 2147483648
  %v1098 = vxor.u32 %v932, 2147483648
  %v1099 = vxor.u32 %v937, 2147483648
  %v1100 = vxor.u32 %v942, 2147483648
  %v1101 = vxor.u32 %v947, 2147483648
  %v1102 = vxor.u32 %v952, 2147483648
  %v1103 = vxor.u32 %v957, 2147483648
  %v1104 = vxor.u32 %v962, 2147483648
  %v1105 = vxor.u32 %v967, 2147483648
  %v1106 = vxor.u32 %v972, 2147483648
  %v1107 = vxor.u32 %v977, 2147483648
  %v1108 = vxor.u32 %v982, 2147483648
  %v1109 = vxor.u32 %v987, 2147483648
  %v1110 = vxor.u32 %v992, 2147483648
  %v1111 = vxor.u32 %v997, 2147483648
  %v1112 = vxor.u32 %v1002, 2147483648
  %v1113 = vxor.u32 %v1007, 2147483648
  %v1114 = vxor.u32 %v1012, 2147483648
  %v1115 = vxor.u32 %v1017, 2147483648
  %v1116 = vxor.u32 %v1022, 2147483648
  %v1117 = vxor.u32 %v1027, 2147483648
  %v1118 = vxor.u32 %v1032, 2147483648
  %v1119 = vxor.u32 %v1037, 2147483648
  %v1120 = vxor.u32 %v1042, 2147483648
  %v1121 = vxor.u32 %v1047, 2147483648
  %v1122 = vxor.u32 %v1052, 2147483648
  %v1123 = vxor.u32 %v1057, 2147483648
  %v1124 = vxor.u32 %v1062, 2147483648
  %v1125 = vxor.u32 %v1067, 2147483648
  %v1126 = vxor.u32 %v1072, 2147483648
  %v1127 = vxor.u32 %v1077, 2147483648
  %v1128 = vmul.f32 %v1080, 1.442695
  %v1129 = vpow.pop %v1128
  %v1130 = vmul.f32 %v1081, 1.442695
  %v1131 = vpow.pop %v1130
  %v1132 = vmul.f32 %v1082, 1.442695
  %v1133 = vpow.pop %v1132
  %v1134 = vmul.f32 %v1083, 1.442695
  %v1135 = vpow.pop %v1134
  %v1136 = vmul.f32 %v1084, 1.442695
  %v1137 = vpow.pop %v1136
  %v1138 = vmul.f32 %v1085, 1.442695
  %v1139 = vpow.pop %v1138
  %v1140 = vmul.f32 %v1086, 1.442695
  %v1141 = vpow.pop %v1140
  %v1142 = vmul.f32 %v1087, 1.442695
  %v1143 = vpow.pop %v1142
  %v1144 = vmul.f32 %v1088, 1.442695
  %v1145 = vpow.pop %v1144
  %v1146 = vmul.f32 %v1089, 1.442695
  %v1147 = vpow.pop %v1146
  %v1148 = vmul.f32 %v1090, 1.442695
  %v1149 = vpow.pop %v1148
  %v1150 = vmul.f32 %v1091, 1.442695
  %v1151 = vpow.pop %v1150
  %v1152 = vmul.f32 %v1092, 1.442695
  %v1153 = vpow.pop %v1152
  %v1154 = vmul.f32 %v1093, 1.442695
  %v1155 = vpow.pop %v1154
  %v1156 = vmul.f32 %v1094, 1.442695
  %v1157 = vpow.pop %v1156
  %v1158 = vmul.f32 %v1095, 1.442695
  %v1159 = vpow.pop %v1158
  %v1160 = vmul.f32 %v1096, 1.442695
  %v1161 = vpow.pop %v1160
  %v1162 = vmul.f32 %v1097, 1.442695
  %v1163 = vpow.pop %v1162
  %v1164 = vmul.f32 %v1098, 1.442695
  %v1165 = vpow.pop %v1164
  %v1166 = vmul.f32 %v1099, 1.442695
  %v1167 = vpow.pop %v1166
  %v1168 = vmul.f32 %v1100, 1.442695
  %v1169 = vpow.pop %v1168
  %v1170 = vmul.f32 %v1101, 1.442695
  %v1171 = vpow.pop %v1170
  %v1172 = vmul.f32 %v1102, 1.442695
  %v1173 = vpow.pop %v1172
  %v1174 = vmul.f32 %v1103, 1.442695
  %v1175 = vpow.pop %v1174
  %v1176 = vmul.f32 %v1104, 1.442695
  %v1177 = vpow.pop %v1176
  %v1178 = vmul.f32 %v1105, 1.442695
  %v1179 = vpow.pop %v1178
  %v1180 = vmul.f32 %v1106, 1.442695
  %v1181 = vpow.pop %v1180
  %v1182 = vmul.f32 %v1107, 1.442695
  %v1183 = vpow.pop %v1182
  %v1184 = vmul.f32 %v1108, 1.442695
  %v1185 = vpow.pop %v1184
  %v1186 = vmul.f32 %v1109, 1.442695
  %v1187 = vpow.pop %v1186
  %v1188 = vmul.f32 %v1110, 1.442695
  %v1189 = vpow.pop %v1188
  %v1190 = vmul.f32 %v1111, 1.442695
  %v1191 = vpow.pop %v1190
  %v1192 = vmul.f32 %v1112, 1.442695
  %v1193 = vpow.pop %v1192
  %v1194 = vmul.f32 %v1113, 1.442695
  %v1195 = vpow.pop %v1194
  %v1196 = vmul.f32 %v1114, 1.442695
  %v1197 = vpow.pop %v1196
  %v1198 = vmul.f32 %v1115, 1.442695
  %v1199 = vpow.pop %v1198
  %v1200 = vmul.f32 %v1116, 1.442695
  %v1201 = vpow.pop %v1200
  %v1202 = vmul.f32 %v1117, 1.442695
  %v1203 = vpow.pop %v1202
  %v1204 = vmul.f32 %v1118, 1.442695
  %v1205 = vpow.pop %v1204
  %v1206 = vmul.f32 %v1119, 1.442695
  %v1207 = vpow.pop %v1206
  %v1208 = vmul.f32 %v1120, 1.442695
  %v1209 = vpow.pop %v1208
  %v1210 = vmul.f32 %v1121, 1.442695
  %v1211 = vpow.pop %v1210
  %v1212 = vmul.f32 %v1122, 1.442695
  %v1213 = vpow.pop %v1212
  %v1214 = vmul.f32 %v1123, 1.442695
  %v1215 = vpow.pop %v1214
  %v1216 = vmul.f32 %v1124, 1.442695
  %v1217 = vpow.pop %v1216
  %v1218 = vmul.f32 %v1125, 1.442695
  %v1219 = vpow.pop %v1218
  %v1220 = vmul.f32 %v1126, 1.442695
  %v1221 = vpow.pop %v1220
  %v1222 = vmul.f32 %v1127, 1.442695
  %v1223 = vpow.pop %v1222
  %v1224 = vadd.f32 %v1129, 1.0
  %v1225 = vadd.f32 %v1131, 1.0
  %v1226 = vadd.f32 %v1133, 1.0
  %v1227 = vadd.f32 %v1135, 1.0
  %v1228 = vadd.f32 %v1137, 1.0
  %v1229 = vadd.f32 %v1139, 1.0
  %v1230 = vadd.f32 %v1141, 1.0
  %v1231 = vadd.f32 %v1143, 1.0
  %v1232 = vadd.f32 %v1145, 1.0
  %v1233 = vadd.f32 %v1147, 1.0
  %v1234 = vadd.f32 %v1149, 1.0
  %v1235 = vadd.f32 %v1151, 1.0
  %v1236 = vadd.f32 %v1153, 1.0
  %v1237 = vadd.f32 %v1155, 1.0
  %v1238 = vadd.f32 %v1157, 1.0
  %v1239 = vadd.f32 %v1159, 1.0
  %v1240 = vadd.f32 %v1161, 1.0
  %v1241 = vadd.f32 %v1163, 1.0
  %v1242 = vadd.f32 %v1165, 1.0
  %v1243 = vadd.f32 %v1167, 1.0
  %v1244 = vadd.f32 %v1169, 1.0
  %v1245 = vadd.f32 %v1171, 1.0
  %v1246 = vadd.f32 %v1173, 1.0
  %v1247 = vadd.f32 %v1175, 1.0
  %v1248 = vadd.f32 %v1177, 1.0
  %v1249 = vadd.f32 %v1179, 1.0
  %v1250 = vadd.f32 %v1181, 1.0
  %v1251 = vadd.f32 %v1183, 1.0
  %v1252 = vadd.f32 %v1185, 1.0
  %v1253 = vadd.f32 %v1187, 1.0
  %v1254 = vadd.f32 %v1189, 1.0
  %v1255 = vadd.f32 %v1191, 1.0
  %v1256 = vadd.f32 %v1193, 1.0
  %v1257 = vadd.f32 %v1195, 1.0
  %v1258 = vadd.f32 %v1197, 1.0
  %v1259 = vadd.f32 %v1199, 1.0
  %v1260 = vadd.f32 %v1201, 1.0
  %v1261 = vadd.f32 %v1203, 1.0
  %v1262 = vadd.f32 %v1205, 1.0
  %v1263 = vadd.f32 %v1207, 1.0
  %v1264 = vadd.f32 %v1209, 1.0
  %v1265 = vadd.f32 %v1211, 1.0
  %v1266 = vadd.f32 %v1213, 1.0
  %v1267 = vadd.f32 %v1215, 1.0
  %v1268 = vadd.f32 %v1217, 1.0
  %v1269 = vadd.f32 %v1219, 1.0
  %v1270 = vadd.f32 %v1221, 1.0
  %v1271 = vadd.f32 %v1223, 1.0
  %v1272 = vrcp.pop %v1224
  %v1273 = vmul.f32 1.0, %v1272
  %v1274 = vrcp.pop %v1225
  %v1275 = vmul.f32 1.0, %v1274
  %v1276 = vrcp.pop %v1226
  %v1277 = vmul.f32 1.0, %v1276
  %v1278 = vrcp.pop %v1227
  %v1279 = vmul.f32 1.0, %v1278
  %v1280 = vrcp.pop %v1228
  %v1281 = vmul.f32 1.0, %v1280
  %v1282 = vrcp.pop %v1229
  %v1283 = vmul.f32 1.0, %v1282
  %v1284 = vrcp.pop %v1230
  %v1285 = vmul.f32 1.0, %v1284
  %v1286 = vrcp.pop %v1231
  %v1287 = vmul.f32 1.0, %v1286
  %v1288 = vrcp.pop %v1232
  %v1289 = vmul.f32 1.0, %v1288
  %v1290 = vrcp.pop %v1233
  %v1291 = vmul.f32 1.0, %v1290
  %v1292 = vrcp.pop %v1234
  %v1293 = vmul.f32 1.0, %v1292
  %v1294 = vrcp.pop %v1235
  %v1295 = vmul.f32 1.0, %v1294
  %v1296 = vrcp.pop %v1236
  %v1297 = vmul.f32 1.0, %v1296
  %v1298 = vrcp.pop %v1237
  %v1299 = vmul.f32 1.0, %v1298
  %v1300 = vrcp.pop %v1238
  %v1301 = vmul.f32 1.0, %v1300
  %v1302 = vrcp.pop %v1239
  %v1303 = vmul.f32 1.0, %v1302
  %v1304 = vrcp.pop %v1240
  %v1305 = vmul.f32 1.0, %v1304
  %v1306 = vrcp.pop %v1241
  %v1307 = vmul.f32 1.0, %v1306
  %v1308 = vrcp.pop %v1242
  %v1309 = vmul.f32 1.0, %v1308
  %v1310 = vrcp.pop %v1243
  %v1311 = vmul.f32 1.0, %v1310
  %v1312 = vrcp.pop %v1244
  %v1313 = vmul.f32 1.0, %v1312
  %v1314 = vrcp.pop %v1245
  %v1315 = vmul.f32 1.0, %v1314
  %v1316 = vrcp.pop %v1246
  %v1317 = vmul.f32 1.0, %v1316
  %v1318 = vrcp.pop %v1247
  %v1319 = vmul.f32 1.0, %v1318
  %v1320 = vrcp.pop %v1248
  %v1321 = vmul.f32 1.0, %v1320
  %v1322 = vrcp.pop %v1249
  %v1323 = vmul.f32 1.0, %v1322
  %v1324 = vrcp.pop %v1250
  %v1325 = vmul.f32 1.0, %v1324
  %v1326 = vrcp.pop %v1251
  %v1327 = vmul.f32 1.0, %v1326
  %v1328 = vrcp.pop %v1252
  %v1329 = vmul.f32 1.0, %v1328
  %v1330 = vrcp.pop %v1253
  %v1331 = vmul.f32 1.0, %v1330
  %v1332 = vrcp.pop %v1254
  %v1333 = vmul.f32 1.0, %v1332
  %v1334 = vrcp.pop %v1255
  %v1335 = vmul.f32 1.0, %v1334
  %v1336 = vrcp.pop %v1256
  %v1337 = vmul.f32 1.0, %v1336
  %v1338 = vrcp.pop %v1257
  %v1339 = vmul.f32 1.0, %v1338
  %v1340 = vrcp.pop %v1258
  %v1341 = vmul.f32 1.0, %v1340
  %v1342 = vrcp.pop %v1259
  %v1343 = vmul.f32 1.0, %v1342
  %v1344 = vrcp.pop %v1260
  %v1345 = vmul.f32 1.0, %v1344
  %v1346 = vrcp.pop %v1261
  %v1347 = vmul.f32 1.0, %v1346
  %v1348 = vrcp.pop %v1262
  %v1349 = vmul.f32 1.0, %v1348
  %v1350 = vrcp.pop %v1263
  %v1351 = vmul.f32 1.0, %v1350
  %v1352 = vrcp.pop %v1264
  %v1353 = vmul.f32 1.0, %v1352
  %v1354 = vrcp.pop %v1265
  %v1355 = vmul.f32 1.0, %v1354
  %v1356 = vrcp.pop %v1266
  %v1357 = vmul.f32 1.0, %v1356
  %v1358 = vrcp.pop %v1267
  %v1359 = vmul.f32 1.0, %v1358
  %v1360 = vrcp.pop %v1268
  %v1361 = vmul.f32 1.0, %v1360
  %v1362 = vrcp.pop %v1269
  %v1363 = vmul.f32 1.0, %v1362
  %v1364 = vrcp.pop %v1270
  %v1365 = vmul.f32 1.0, %v1364
  %v1366 = vrcp.pop %v1271
  %v1367 = vmul.f32 1.0, %v1366
  %v1368 = vmul.f32 %v602, %v1273
  %v1369 = vmul.f32 %v607, %v1275
  %v1370 = vmul.f32 %v612, %v1277
  %v1371 = vmul.f32 %v617, %v1279
  %v1372 = vmul.f32 %v622, %v1281
  %v1373 = vmul.f32 %v627, %v1283
  %v1374 = vmul.f32 %v632, %v1285
  %v1375 = vmul.f32 %v637, %v1287
  %v1376 = vmul.f32 %v642, %v1289
  %v1377 = vmul.f32 %v647, %v1291
  %v1378 = vmul.f32 %v652, %v1293
  %v1379 = vmul.f32 %v657, %v1295
  %v1380 = vmul.f32 %v662, %v1297
  %v1381 = vmul.f32 %v667, %v1299
  %v1382 = vmul.f32 %v672, %v1301
  %v1383 = vmul.f32 %v677, %v1303
  %v1384 = vmul.f32 %v682, %v1305
  %v1385 = vmul.f32 %v687, %v1307
  %v1386 = vmul.f32 %v692, %v1309
  %v1387 = vmul.f32 %v697, %v1311
  %v1388 = vmul.f32 %v702, %v1313
  %v1389 = vmul.f32 %v707, %v1315
  %v1390 = vmul.f32 %v712, %v1317
  %v1391 = vmul.f32 %v717, %v1319
  %v1392 = vmul.f32 %v722, %v1321
  %v1393 = vmul.f32 %v727, %v1323
  %v1394 = vmul.f32 %v732, %v1325
  %v1395 = vmul.f32 %v737, %v1327
  %v1396 = vmul.f32 %v742, %v1329
  %v1397 = vmul.f32 %v747, %v1331
  %v1398 = vmul.f32 %v752, %v1333
  %v1399 = vmul.f32 %v757, %v1335
  %v1400 = vmul.f32 %v762, %v1337
  %v1401 = vmul.f32 %v767, %v1339
  %v1402 = vmul.f32 %v772, %v1341
  %v1403 = vmul.f32 %v777, %v1343
  %v1404 = vmul.f32 %v782, %v1345
  %v1405 = vmul.f32 %v787, %v1347
  %v1406 = vmul.f32 %v792, %v1349
  %v1407 = vmul.f32 %v797, %v1351
  %v1408 = vmul.f32 %v802, %v1353
  %v1409 = vmul.f32 %v807, %v1355
  %v1410 = vmul.f32 %v812, %v1357
  %v1411 = vmul.f32 %v817, %v1359
  %v1412 = vmul.f32 %v822, %v1361
  %v1413 = vmul.f32 %v827, %v1363
  %v1414 = vmul.f32 %v832, %v1365
  %v1415 = vmul.f32 %v837, %v1367
  %v1416 = vld [vmem:[%s3] sm:$0xff]
  %v1417 = vld [vmem:[%s3 + $0x8] sm:$0xff]
  %v1418 = vld [vmem:[%s3 + $0x10] sm:$0xff]
  %v1419 = vld [vmem:[%s3 + $0x18] sm:$0x1]
  %s1420 = scalar_lea.vmem %s3, 32
  %v1421 = vld [vmem:[%s1420] sm:$0xff]
  %v1422 = vld [vmem:[%s1420 + $0x8] sm:$0xff]
  %v1423 = vld [vmem:[%s1420 + $0x10] sm:$0xff]
  %v1424 = vld [vmem:[%s1420 + $0x18] sm:$0x1]
  %vm1425 = vcmask 203776
  %v1427 = vsel %vm1425, %v1372, 0
  %v1430 = vsel %vm1425, %v1373, 0
  %v1433 = vsel %vm1425, %v1374, 0
  %v1436 = vsel %vm1425, %v1375, 0
  %vm1438 = vcmask 1040384
  %v1440 = vsel %vm1438, %v1424, 0
  %1442 = vmatprep.subr.mxu0 0.0
  %1443 = vmatpush1.msra.mxu0 0.0
  %1444 = vmatprep.subr.mxu0 0.0
  %1445 = vmatpush1.msra.mxu0 0.0
  %1446 = vmatprep.subr.mxu0 0.0
  %1447 = vmatpush1.msra.mxu0 0.0
  %1448 = vmatprep.subr.mxu0 0.0
  %1449 = vmatpush1.msra.mxu0 0.0
  %1450 = vmatprep.subr.mxu0 0.0
  %1451 = vmatpush1.msra.mxu0 0.0
  %1452 = vmatprep.subr.mxu0 0.0
  %1453 = vmatpush1.msra.mxu0 0.0
  %1454 = vmatprep.subr.mxu0 0.0
  %1455 = vmatpush1.msra.mxu0 0.0
  %1456 = vmatprep.subr.mxu0 0.0
  %1457 = vmatpush1.msra.mxu0 0.0
  %1458 = vmatprep.subr.mxu0 0.0
  %1459 = vmatpush1.msra.mxu0 0.0
  %1460 = vmatprep.subr.mxu0 0.0
  %1461 = vmatpush1.msra.mxu0 0.0
  %1462 = vmatprep.subr.mxu0 0.0
  %1463 = vmatpush1.msra.mxu0 0.0
  %1464 = vmatprep.subr.mxu0 0.0
  %1465 = vmatpush1.msra.mxu0 0.0
  %1466 = vmatprep.subr.mxu0 0.0
  %1467 = vmatpush1.msra.mxu0 %v1440
  %1468 = vmatprep.subr.mxu0 0.0
  %1469 = vmatpush1.msra.mxu0 %v1423
  %1470 = vmatprep.subr.mxu0 0.0
  %1471 = vmatpush1.msra.mxu0 %v1422
  %1472 = vmatprep.subr.mxu0 0.0
  %1473 = vmatpush1.msra.mxu0 %v1421
  %1474 = vmatprep.subr.mxu0 0.0
  %1475 = vmatpush2.msra.mxu0 0.0
  %1476 = vmatprep.subr.mxu0 0.0
  %1477 = vmatpush2.msra.mxu0 0.0
  %1478 = vmatprep.subr.mxu0 0.0
  %1479 = vmatpush2.msra.mxu0 0.0
  %1480 = vmatprep.subr.mxu0 0.0
  %1481 = vmatpush2.msra.mxu0 0.0
  %1482 = vmatprep.subr.mxu0 0.0
  %1483 = vmatpush2.msra.mxu0 0.0
  %1484 = vmatprep.subr.mxu0 0.0
  %1485 = vmatpush2.msra.mxu0 0.0
  %1486 = vmatprep.subr.mxu0 0.0
  %1487 = vmatpush2.msra.mxu0 0.0
  %1488 = vmatprep.subr.mxu0 0.0
  %1489 = vmatpush2.msra.mxu0 0.0
  %1490 = vmatprep.subr.mxu0 0.0
  %1491 = vmatpush2.msra.mxu0 0.0
  %1492 = vmatprep.subr.mxu0 0.0
  %1493 = vmatpush2.msra.mxu0 0.0
  %1494 = vmatprep.subr.mxu0 0.0
  %1495 = vmatpush2.msra.mxu0 0.0
  %1496 = vmatprep.subr.mxu0 0.0
  %1497 = vmatpush2.msra.mxu0 0.0
  %1498 = vmatprep.subr.mxu0 0.0
  %1499 = vmatpush2.msra.mxu0 0.0
  %1500 = vmatprep.subr.mxu0 0.0
  %1501 = vmatpush2.msra.mxu0 0.0
  %1502 = vmatprep.subr.mxu0 0.0
  %1503 = vmatpush2.msra.mxu0 0.0
  %1504 = vmatprep.subr.mxu0 0.0
  %1505 = vmatpush2.msra.mxu0 0.0
  %1506 = vmatprep.mubr.f32.mxu0 0.0
  %1507 = vmatmul.mubr.f32.gmra.mxu0 %v1427
  %v1508 = vpop.f32.mrf.mxu0
  %v1509 = vadd.f32 0.0, %v1508
  %v1510 = vpop.f32.mrf.mxu0
  %1511 = vmatprep.mubr.f32.mxu0 0.0
  %1512 = vmatmul.mubr.f32.gmra.mxu0 %v1430
  %v1513 = vpop.f32.mrf.mxu0
  %v1514 = vadd.f32 0.0, %v1513
  %v1515 = vpop.f32.mrf.mxu0
  %1516 = vmatprep.mubr.f32.mxu0 0.0
  %1517 = vmatmul.mubr.f32.gmra.mxu0 %v1433
  %v1518 = vpop.f32.mrf.mxu0
  %v1519 = vadd.f32 0.0, %v1518
  %v1520 = vpop.f32.mrf.mxu0
  %1521 = vmatprep.mubr.f32.mxu0 0.0
  %1522 = vmatmul.mubr.f32.gmra.mxu0 %v1436
  %v1523 = vpop.f32.mrf.mxu0
  %v1524 = vadd.f32 0.0, %v1523
  %v1525 = vpop.f32.mrf.mxu0
  %1526 = vdwg.mxu0
  %v1528 = vsel %vm1425, %v1368, 0
  %v1531 = vsel %vm1425, %v1369, 0
  %v1534 = vsel %vm1425, %v1370, 0
  %v1537 = vsel %vm1425, %v1371, 0
  %v1540 = vsel %vm1438, %v1419, 0
  %1542 = vmatprep.subr.mxu0 0.0
  %1543 = vmatpush1.msra.mxu0 0.0
  %1544 = vmatprep.subr.mxu0 0.0
  %1545 = vmatpush1.msra.mxu0 0.0
  %1546 = vmatprep.subr.mxu0 0.0
  %1547 = vmatpush1.msra.mxu0 0.0
  %1548 = vmatprep.subr.mxu0 0.0
  %1549 = vmatpush1.msra.mxu0 0.0
  %1550 = vmatprep.subr.mxu0 0.0
  %1551 = vmatpush1.msra.mxu0 0.0
  %1552 = vmatprep.subr.mxu0 0.0
  %1553 = vmatpush1.msra.mxu0 0.0
  %1554 = vmatprep.subr.mxu0 0.0
  %1555 = vmatpush1.msra.mxu0 0.0
  %1556 = vmatprep.subr.mxu0 0.0
  %1557 = vmatpush1.msra.mxu0 0.0
  %1558 = vmatprep.subr.mxu0 0.0
  %1559 = vmatpush1.msra.mxu0 0.0
  %1560 = vmatprep.subr.mxu0 0.0
  %1561 = vmatpush1.msra.mxu0 0.0
  %1562 = vmatprep.subr.mxu0 0.0
  %1563 = vmatpush1.msra.mxu0 0.0
  %1564 = vmatprep.subr.mxu0 0.0
  %1565 = vmatpush1.msra.mxu0 0.0
  %1566 = vmatprep.subr.mxu0 0.0
  %1567 = vmatpush1.msra.mxu0 %v1540
  %1568 = vmatprep.subr.mxu0 0.0
  %1569 = vmatpush1.msra.mxu0 %v1418
  %1570 = vmatprep.subr.mxu0 0.0
  %1571 = vmatpush1.msra.mxu0 %v1417
  %1572 = vmatprep.subr.mxu0 0.0
  %1573 = vmatpush1.msra.mxu0 %v1416
  %1574 = vmatprep.subr.mxu0 0.0
  %1575 = vmatpush2.msra.mxu0 0.0
  %1576 = vmatprep.subr.mxu0 0.0
  %1577 = vmatpush2.msra.mxu0 0.0
  %1578 = vmatprep.subr.mxu0 0.0
  %1579 = vmatpush2.msra.mxu0 0.0
  %1580 = vmatprep.subr.mxu0 0.0
  %1581 = vmatpush2.msra.mxu0 0.0
  %1582 = vmatprep.subr.mxu0 0.0
  %1583 = vmatpush2.msra.mxu0 0.0
  %1584 = vmatprep.subr.mxu0 0.0
  %1585 = vmatpush2.msra.mxu0 0.0
  %1586 = vmatprep.subr.mxu0 0.0
  %1587 = vmatpush2.msra.mxu0 0.0
  %1588 = vmatprep.subr.mxu0 0.0
  %1589 = vmatpush2.msra.mxu0 0.0
  %1590 = vmatprep.subr.mxu0 0.0
  %1591 = vmatpush2.msra.mxu0 0.0
  %1592 = vmatprep.subr.mxu0 0.0
  %1593 = vmatpush2.msra.mxu0 0.0
  %1594 = vmatprep.subr.mxu0 0.0
  %1595 = vmatpush2.msra.mxu0 0.0
  %1596 = vmatprep.subr.mxu0 0.0
  %1597 = vmatpush2.msra.mxu0 0.0
  %1598 = vmatprep.subr.mxu0 0.0
  %1599 = vmatpush2.msra.mxu0 0.0
  %1600 = vmatprep.subr.mxu0 0.0
  %1601 = vmatpush2.msra.mxu0 0.0
  %1602 = vmatprep.subr.mxu0 0.0
  %1603 = vmatpush2.msra.mxu0 0.0
  %1604 = vmatprep.subr.mxu0 0.0
  %1605 = vmatpush2.msra.mxu0 0.0
  %1606 = vmatprep.mubr.f32.mxu0 0.0
  %1607 = vmatmul.mubr.f32.gmra.mxu0 %v1528
  %v1608 = vpop.f32.mrf.mxu0
  %v1609 = vadd.f32 %v1509, %v1608
  %v1610 = vpop.f32.mrf.mxu0
  %1611 = vmatprep.mubr.f32.mxu0 0.0
  %1612 = vmatmul.mubr.f32.gmra.mxu0 %v1531
  %v1613 = vpop.f32.mrf.mxu0
  %v1614 = vadd.f32 %v1514, %v1613
  %v1615 = vpop.f32.mrf.mxu0
  %1616 = vmatprep.mubr.f32.mxu0 0.0
  %1617 = vmatmul.mubr.f32.gmra.mxu0 %v1534
  %v1618 = vpop.f32.mrf.mxu0
  %v1619 = vadd.f32 %v1519, %v1618
  %v1620 = vpop.f32.mrf.mxu0
  %1621 = vmatprep.mubr.f32.mxu0 0.0
  %1622 = vmatmul.mubr.f32.gmra.mxu0 %v1537
  %v1623 = vpop.f32.mrf.mxu0
  %v1624 = vadd.f32 %v1524, %v1623
  %v1625 = vpop.f32.mrf.mxu0
  %1626 = vdwg.mxu0
  %s1627 = scalar_lea.vmem %s3, 64
  %v1628 = vld [vmem:[%s1627] sm:$0xff]
  %v1629 = vld [vmem:[%s1627 + $0x8] sm:$0xff]
  %v1630 = vld [vmem:[%s1627 + $0x10] sm:$0xff]
  %v1631 = vld [vmem:[%s1627 + $0x18] sm:$0x1]
  %v1633 = vsel %vm1425, %v1376, 0
  %v1636 = vsel %vm1425, %v1377, 0
  %v1639 = vsel %vm1425, %v1378, 0
  %v1642 = vsel %vm1425, %v1379, 0
  %v1645 = vsel %vm1438, %v1631, 0
  %1647 = vmatprep.subr.mxu0 0.0
  %1648 = vmatpush1.msra.mxu0 0.0
  %1649 = vmatprep.subr.mxu0 0.0
  %1650 = vmatpush1.msra.mxu0 0.0
  %1651 = vmatprep.subr.mxu0 0.0
  %1652 = vmatpush1.msra.mxu0 0.0
  %1653 = vmatprep.subr.mxu0 0.0
  %1654 = vmatpush1.msra.mxu0 0.0
  %1655 = vmatprep.subr.mxu0 0.0
  %1656 = vmatpush1.msra.mxu0 0.0
  %1657 = vmatprep.subr.mxu0 0.0
  %1658 = vmatpush1.msra.mxu0 0.0
  %1659 = vmatprep.subr.mxu0 0.0
  %1660 = vmatpush1.msra.mxu0 0.0
  %1661 = vmatprep.subr.mxu0 0.0
  %1662 = vmatpush1.msra.mxu0 0.0
  %1663 = vmatprep.subr.mxu0 0.0
  %1664 = vmatpush1.msra.mxu0 0.0
  %1665 = vmatprep.subr.mxu0 0.0
  %1666 = vmatpush1.msra.mxu0 0.0
  %1667 = vmatprep.subr.mxu0 0.0
  %1668 = vmatpush1.msra.mxu0 0.0
  %1669 = vmatprep.subr.mxu0 0.0
  %1670 = vmatpush1.msra.mxu0 0.0
  %1671 = vmatprep.subr.mxu0 0.0
  %1672 = vmatpush1.msra.mxu0 %v1645
  %1673 = vmatprep.subr.mxu0 0.0
  %1674 = vmatpush1.msra.mxu0 %v1630
  %1675 = vmatprep.subr.mxu0 0.0
  %1676 = vmatpush1.msra.mxu0 %v1629
  %1677 = vmatprep.subr.mxu0 0.0
  %1678 = vmatpush1.msra.mxu0 %v1628
  %1679 = vmatprep.subr.mxu0 0.0
  %1680 = vmatpush2.msra.mxu0 0.0
  %1681 = vmatprep.subr.mxu0 0.0
  %1682 = vmatpush2.msra.mxu0 0.0
  %1683 = vmatprep.subr.mxu0 0.0
  %1684 = vmatpush2.msra.mxu0 0.0
  %1685 = vmatprep.subr.mxu0 0.0
  %1686 = vmatpush2.msra.mxu0 0.0
  %1687 = vmatprep.subr.mxu0 0.0
  %1688 = vmatpush2.msra.mxu0 0.0
  %1689 = vmatprep.subr.mxu0 0.0
  %1690 = vmatpush2.msra.mxu0 0.0
  %1691 = vmatprep.subr.mxu0 0.0
  %1692 = vmatpush2.msra.mxu0 0.0
  %1693 = vmatprep.subr.mxu0 0.0
  %1694 = vmatpush2.msra.mxu0 0.0
  %1695 = vmatprep.subr.mxu0 0.0
  %1696 = vmatpush2.msra.mxu0 0.0
  %1697 = vmatprep.subr.mxu0 0.0
  %1698 = vmatpush2.msra.mxu0 0.0
  %1699 = vmatprep.subr.mxu0 0.0
  %1700 = vmatpush2.msra.mxu0 0.0
  %1701 = vmatprep.subr.mxu0 0.0
  %1702 = vmatpush2.msra.mxu0 0.0
  %1703 = vmatprep.subr.mxu0 0.0
  %1704 = vmatpush2.msra.mxu0 0.0
  %1705 = vmatprep.subr.mxu0 0.0
  %1706 = vmatpush2.msra.mxu0 0.0
  %1707 = vmatprep.subr.mxu0 0.0
  %1708 = vmatpush2.msra.mxu0 0.0
  %1709 = vmatprep.subr.mxu0 0.0
  %1710 = vmatpush2.msra.mxu0 0.0
  %1711 = vmatprep.mubr.f32.mxu0 0.0
  %1712 = vmatmul.mubr.f32.gmra.mxu0 %v1633
  %v1713 = vpop.f32.mrf.mxu0
  %v1714 = vadd.f32 0.0, %v1713
  %v1715 = vpop.f32.mrf.mxu0
  %1716 = vmatprep.mubr.f32.mxu0 0.0
  %1717 = vmatmul.mubr.f32.gmra.mxu0 %v1636
  %v1718 = vpop.f32.mrf.mxu0
  %v1719 = vadd.f32 0.0, %v1718
  %v1720 = vpop.f32.mrf.mxu0
  %1721 = vmatprep.mubr.f32.mxu0 0.0
  %1722 = vmatmul.mubr.f32.gmra.mxu0 %v1639
  %v1723 = vpop.f32.mrf.mxu0
  %v1724 = vadd.f32 0.0, %v1723
  %v1725 = vpop.f32.mrf.mxu0
  %1726 = vmatprep.mubr.f32.mxu0 0.0
  %1727 = vmatmul.mubr.f32.gmra.mxu0 %v1642
  %v1728 = vpop.f32.mrf.mxu0
  %v1729 = vadd.f32 0.0, %v1728
  %v1730 = vpop.f32.mrf.mxu0
  %1731 = vdwg.mxu0
  %v1732 = vadd.f32 %v1609, %v1714
  %v1733 = vadd.f32 %v1614, %v1719
  %v1734 = vadd.f32 %v1619, %v1724
  %v1735 = vadd.f32 %v1624, %v1729
  %s1736 = scalar_lea.vmem %s3, 96
  %v1737 = vld [vmem:[%s1736] sm:$0xff]
  %v1738 = vld [vmem:[%s1736 + $0x8] sm:$0xff]
  %v1739 = vld [vmem:[%s1736 + $0x10] sm:$0xff]
  %v1740 = vld [vmem:[%s1736 + $0x18] sm:$0x1]
  %v1742 = vsel %vm1425, %v1380, 0
  %v1745 = vsel %vm1425, %v1381, 0
  %v1748 = vsel %vm1425, %v1382, 0
  %v1751 = vsel %vm1425, %v1383, 0
  %v1754 = vsel %vm1438, %v1740, 0
  %1756 = vmatprep.subr.mxu0 0.0
  %1757 = vmatpush1.msra.mxu0 0.0
  %1758 = vmatprep.subr.mxu0 0.0
  %1759 = vmatpush1.msra.mxu0 0.0
  %1760 = vmatprep.subr.mxu0 0.0
  %1761 = vmatpush1.msra.mxu0 0.0
  %1762 = vmatprep.subr.mxu0 0.0
  %1763 = vmatpush1.msra.mxu0 0.0
  %1764 = vmatprep.subr.mxu0 0.0
  %1765 = vmatpush1.msra.mxu0 0.0
  %1766 = vmatprep.subr.mxu0 0.0
  %1767 = vmatpush1.msra.mxu0 0.0
  %1768 = vmatprep.subr.mxu0 0.0
  %1769 = vmatpush1.msra.mxu0 0.0
  %1770 = vmatprep.subr.mxu0 0.0
  %1771 = vmatpush1.msra.mxu0 0.0
  %1772 = vmatprep.subr.mxu0 0.0
  %1773 = vmatpush1.msra.mxu0 0.0
  %1774 = vmatprep.subr.mxu0 0.0
  %1775 = vmatpush1.msra.mxu0 0.0
  %1776 = vmatprep.subr.mxu0 0.0
  %1777 = vmatpush1.msra.mxu0 0.0
  %1778 = vmatprep.subr.mxu0 0.0
  %1779 = vmatpush1.msra.mxu0 0.0
  %1780 = vmatprep.subr.mxu0 0.0
  %1781 = vmatpush1.msra.mxu0 %v1754
  %1782 = vmatprep.subr.mxu0 0.0
  %1783 = vmatpush1.msra.mxu0 %v1739
  %1784 = vmatprep.subr.mxu0 0.0
  %1785 = vmatpush1.msra.mxu0 %v1738
  %1786 = vmatprep.subr.mxu0 0.0
  %1787 = vmatpush1.msra.mxu0 %v1737
  %1788 = vmatprep.subr.mxu0 0.0
  %1789 = vmatpush2.msra.mxu0 0.0
  %1790 = vmatprep.subr.mxu0 0.0
  %1791 = vmatpush2.msra.mxu0 0.0
  %1792 = vmatprep.subr.mxu0 0.0
  %1793 = vmatpush2.msra.mxu0 0.0
  %1794 = vmatprep.subr.mxu0 0.0
  %1795 = vmatpush2.msra.mxu0 0.0
  %1796 = vmatprep.subr.mxu0 0.0
  %1797 = vmatpush2.msra.mxu0 0.0
  %1798 = vmatprep.subr.mxu0 0.0
  %1799 = vmatpush2.msra.mxu0 0.0
  %1800 = vmatprep.subr.mxu0 0.0
  %1801 = vmatpush2.msra.mxu0 0.0
  %1802 = vmatprep.subr.mxu0 0.0
  %1803 = vmatpush2.msra.mxu0 0.0
  %1804 = vmatprep.subr.mxu0 0.0
  %1805 = vmatpush2.msra.mxu0 0.0
  %1806 = vmatprep.subr.mxu0 0.0
  %1807 = vmatpush2.msra.mxu0 0.0
  %1808 = vmatprep.subr.mxu0 0.0
  %1809 = vmatpush2.msra.mxu0 0.0
  %1810 = vmatprep.subr.mxu0 0.0
  %1811 = vmatpush2.msra.mxu0 0.0
  %1812 = vmatprep.subr.mxu0 0.0
  %1813 = vmatpush2.msra.mxu0 0.0
  %1814 = vmatprep.subr.mxu0 0.0
  %1815 = vmatpush2.msra.mxu0 0.0
  %1816 = vmatprep.subr.mxu0 0.0
  %1817 = vmatpush2.msra.mxu0 0.0
  %1818 = vmatprep.subr.mxu0 0.0
  %1819 = vmatpush2.msra.mxu0 0.0
  %1820 = vmatprep.mubr.f32.mxu0 0.0
  %1821 = vmatmul.mubr.f32.gmra.mxu0 %v1742
  %v1822 = vpop.f32.mrf.mxu0
  %v1823 = vadd.f32 0.0, %v1822
  %v1824 = vpop.f32.mrf.mxu0
  %1825 = vmatprep.mubr.f32.mxu0 0.0
  %1826 = vmatmul.mubr.f32.gmra.mxu0 %v1745
  %v1827 = vpop.f32.mrf.mxu0
  %v1828 = vadd.f32 0.0, %v1827
  %v1829 = vpop.f32.mrf.mxu0
  %1830 = vmatprep.mubr.f32.mxu0 0.0
  %1831 = vmatmul.mubr.f32.gmra.mxu0 %v1748
  %v1832 = vpop.f32.mrf.mxu0
  %v1833 = vadd.f32 0.0, %v1832
  %v1834 = vpop.f32.mrf.mxu0
  %1835 = vmatprep.mubr.f32.mxu0 0.0
  %1836 = vmatmul.mubr.f32.gmra.mxu0 %v1751
  %v1837 = vpop.f32.mrf.mxu0
  %v1838 = vadd.f32 0.0, %v1837
  %v1839 = vpop.f32.mrf.mxu0
  %1840 = vdwg.mxu0
  %v1841 = vadd.f32 %v1732, %v1823
  %v1842 = vadd.f32 %v1733, %v1828
  %v1843 = vadd.f32 %v1734, %v1833
  %v1844 = vadd.f32 %v1735, %v1838
  %s1845 = scalar_lea.vmem %s3, 128
  %v1846 = vld [vmem:[%s1845] sm:$0xff]
  %v1847 = vld [vmem:[%s1845 + $0x8] sm:$0xff]
  %v1848 = vld [vmem:[%s1845 + $0x10] sm:$0xff]
  %v1849 = vld [vmem:[%s1845 + $0x18] sm:$0x1]
  %v1851 = vsel %vm1425, %v1384, 0
  %v1854 = vsel %vm1425, %v1385, 0
  %v1857 = vsel %vm1425, %v1386, 0
  %v1860 = vsel %vm1425, %v1387, 0
  %v1863 = vsel %vm1438, %v1849, 0
  %1865 = vmatprep.subr.mxu0 0.0
  %1866 = vmatpush1.msra.mxu0 0.0
  %1867 = vmatprep.subr.mxu0 0.0
  %1868 = vmatpush1.msra.mxu0 0.0
  %1869 = vmatprep.subr.mxu0 0.0
  %1870 = vmatpush1.msra.mxu0 0.0
  %1871 = vmatprep.subr.mxu0 0.0
  %1872 = vmatpush1.msra.mxu0 0.0
  %1873 = vmatprep.subr.mxu0 0.0
  %1874 = vmatpush1.msra.mxu0 0.0
  %1875 = vmatprep.subr.mxu0 0.0
  %1876 = vmatpush1.msra.mxu0 0.0
  %1877 = vmatprep.subr.mxu0 0.0
  %1878 = vmatpush1.msra.mxu0 0.0
  %1879 = vmatprep.subr.mxu0 0.0
  %1880 = vmatpush1.msra.mxu0 0.0
  %1881 = vmatprep.subr.mxu0 0.0
  %1882 = vmatpush1.msra.mxu0 0.0
  %1883 = vmatprep.subr.mxu0 0.0
  %1884 = vmatpush1.msra.mxu0 0.0
  %1885 = vmatprep.subr.mxu0 0.0
  %1886 = vmatpush1.msra.mxu0 0.0
  %1887 = vmatprep.subr.mxu0 0.0
  %1888 = vmatpush1.msra.mxu0 0.0
  %1889 = vmatprep.subr.mxu0 0.0
  %1890 = vmatpush1.msra.mxu0 %v1863
  %1891 = vmatprep.subr.mxu0 0.0
  %1892 = vmatpush1.msra.mxu0 %v1848
  %1893 = vmatprep.subr.mxu0 0.0
  %1894 = vmatpush1.msra.mxu0 %v1847
  %1895 = vmatprep.subr.mxu0 0.0
  %1896 = vmatpush1.msra.mxu0 %v1846
  %1897 = vmatprep.subr.mxu0 0.0
  %1898 = vmatpush2.msra.mxu0 0.0
  %1899 = vmatprep.subr.mxu0 0.0
  %1900 = vmatpush2.msra.mxu0 0.0
  %1901 = vmatprep.subr.mxu0 0.0
  %1902 = vmatpush2.msra.mxu0 0.0
  %1903 = vmatprep.subr.mxu0 0.0
  %1904 = vmatpush2.msra.mxu0 0.0
  %1905 = vmatprep.subr.mxu0 0.0
  %1906 = vmatpush2.msra.mxu0 0.0
  %1907 = vmatprep.subr.mxu0 0.0
  %1908 = vmatpush2.msra.mxu0 0.0
  %1909 = vmatprep.subr.mxu0 0.0
  %1910 = vmatpush2.msra.mxu0 0.0
  %1911 = vmatprep.subr.mxu0 0.0
  %1912 = vmatpush2.msra.mxu0 0.0
  %1913 = vmatprep.subr.mxu0 0.0
  %1914 = vmatpush2.msra.mxu0 0.0
  %1915 = vmatprep.subr.mxu0 0.0
  %1916 = vmatpush2.msra.mxu0 0.0
  %1917 = vmatprep.subr.mxu0 0.0
  %1918 = vmatpush2.msra.mxu0 0.0
  %1919 = vmatprep.subr.mxu0 0.0
  %1920 = vmatpush2.msra.mxu0 0.0
  %1921 = vmatprep.subr.mxu0 0.0
  %1922 = vmatpush2.msra.mxu0 0.0
  %1923 = vmatprep.subr.mxu0 0.0
  %1924 = vmatpush2.msra.mxu0 0.0
  %1925 = vmatprep.subr.mxu0 0.0
  %1926 = vmatpush2.msra.mxu0 0.0
  %1927 = vmatprep.subr.mxu0 0.0
  %1928 = vmatpush2.msra.mxu0 0.0
  %1929 = vmatprep.mubr.f32.mxu0 0.0
  %1930 = vmatmul.mubr.f32.gmra.mxu0 %v1851
  %v1931 = vpop.f32.mrf.mxu0
  %v1932 = vadd.f32 0.0, %v1931
  %v1933 = vpop.f32.mrf.mxu0
  %1934 = vmatprep.mubr.f32.mxu0 0.0
  %1935 = vmatmul.mubr.f32.gmra.mxu0 %v1854
  %v1936 = vpop.f32.mrf.mxu0
  %v1937 = vadd.f32 0.0, %v1936
  %v1938 = vpop.f32.mrf.mxu0
  %1939 = vmatprep.mubr.f32.mxu0 0.0
  %1940 = vmatmul.mubr.f32.gmra.mxu0 %v1857
  %v1941 = vpop.f32.mrf.mxu0
  %v1942 = vadd.f32 0.0, %v1941
  %v1943 = vpop.f32.mrf.mxu0
  %1944 = vmatprep.mubr.f32.mxu0 0.0
  %1945 = vmatmul.mubr.f32.gmra.mxu0 %v1860
  %v1946 = vpop.f32.mrf.mxu0
  %v1947 = vadd.f32 0.0, %v1946
  %v1948 = vpop.f32.mrf.mxu0
  %1949 = vdwg.mxu0
  %v1950 = vadd.f32 %v1841, %v1932
  %v1951 = vadd.f32 %v1842, %v1937
  %v1952 = vadd.f32 %v1843, %v1942
  %v1953 = vadd.f32 %v1844, %v1947
  %s1954 = scalar_lea.vmem %s3, 160
  %v1955 = vld [vmem:[%s1954] sm:$0xff]
  %v1956 = vld [vmem:[%s1954 + $0x8] sm:$0xff]
  %v1957 = vld [vmem:[%s1954 + $0x10] sm:$0xff]
  %v1958 = vld [vmem:[%s1954 + $0x18] sm:$0x1]
  %v1960 = vsel %vm1425, %v1388, 0
  %v1963 = vsel %vm1425, %v1389, 0
  %v1966 = vsel %vm1425, %v1390, 0
  %v1969 = vsel %vm1425, %v1391, 0
  %v1972 = vsel %vm1438, %v1958, 0
  %1974 = vmatprep.subr.mxu0 0.0
  %1975 = vmatpush1.msra.mxu0 0.0
  %1976 = vmatprep.subr.mxu0 0.0
  %1977 = vmatpush1.msra.mxu0 0.0
  %1978 = vmatprep.subr.mxu0 0.0
  %1979 = vmatpush1.msra.mxu0 0.0
  %1980 = vmatprep.subr.mxu0 0.0
  %1981 = vmatpush1.msra.mxu0 0.0
  %1982 = vmatprep.subr.mxu0 0.0
  %1983 = vmatpush1.msra.mxu0 0.0
  %1984 = vmatprep.subr.mxu0 0.0
  %1985 = vmatpush1.msra.mxu0 0.0
  %1986 = vmatprep.subr.mxu0 0.0
  %1987 = vmatpush1.msra.mxu0 0.0
  %1988 = vmatprep.subr.mxu0 0.0
  %1989 = vmatpush1.msra.mxu0 0.0
  %1990 = vmatprep.subr.mxu0 0.0
  %1991 = vmatpush1.msra.mxu0 0.0
  %1992 = vmatprep.subr.mxu0 0.0
  %1993 = vmatpush1.msra.mxu0 0.0
  %1994 = vmatprep.subr.mxu0 0.0
  %1995 = vmatpush1.msra.mxu0 0.0
  %1996 = vmatprep.subr.mxu0 0.0
  %1997 = vmatpush1.msra.mxu0 0.0
  %1998 = vmatprep.subr.mxu0 0.0
  %1999 = vmatpush1.msra.mxu0 %v1972
  %2000 = vmatprep.subr.mxu0 0.0
  %2001 = vmatpush1.msra.mxu0 %v1957
  %2002 = vmatprep.subr.mxu0 0.0
  %2003 = vmatpush1.msra.mxu0 %v1956
  %2004 = vmatprep.subr.mxu0 0.0
  %2005 = vmatpush1.msra.mxu0 %v1955
  %2006 = vmatprep.subr.mxu0 0.0
  %2007 = vmatpush2.msra.mxu0 0.0
  %2008 = vmatprep.subr.mxu0 0.0
  %2009 = vmatpush2.msra.mxu0 0.0
  %2010 = vmatprep.subr.mxu0 0.0
  %2011 = vmatpush2.msra.mxu0 0.0
  %2012 = vmatprep.subr.mxu0 0.0
  %2013 = vmatpush2.msra.mxu0 0.0
  %2014 = vmatprep.subr.mxu0 0.0
  %2015 = vmatpush2.msra.mxu0 0.0
  %2016 = vmatprep.subr.mxu0 0.0
  %2017 = vmatpush2.msra.mxu0 0.0
  %2018 = vmatprep.subr.mxu0 0.0
  %2019 = vmatpush2.msra.mxu0 0.0
  %2020 = vmatprep.subr.mxu0 0.0
  %2021 = vmatpush2.msra.mxu0 0.0
  %2022 = vmatprep.subr.mxu0 0.0
  %2023 = vmatpush2.msra.mxu0 0.0
  %2024 = vmatprep.subr.mxu0 0.0
  %2025 = vmatpush2.msra.mxu0 0.0
  %2026 = vmatprep.subr.mxu0 0.0
  %2027 = vmatpush2.msra.mxu0 0.0
  %2028 = vmatprep.subr.mxu0 0.0
  %2029 = vmatpush2.msra.mxu0 0.0
  %2030 = vmatprep.subr.mxu0 0.0
  %2031 = vmatpush2.msra.mxu0 0.0
  %2032 = vmatprep.subr.mxu0 0.0
  %2033 = vmatpush2.msra.mxu0 0.0
  %2034 = vmatprep.subr.mxu0 0.0
  %2035 = vmatpush2.msra.mxu0 0.0
  %2036 = vmatprep.subr.mxu0 0.0
  %2037 = vmatpush2.msra.mxu0 0.0
  %2038 = vmatprep.mubr.f32.mxu0 0.0
  %2039 = vmatmul.mubr.f32.gmra.mxu0 %v1960
  %v2040 = vpop.f32.mrf.mxu0
  %v2041 = vadd.f32 0.0, %v2040
  %v2042 = vpop.f32.mrf.mxu0
  %2043 = vmatprep.mubr.f32.mxu0 0.0
  %2044 = vmatmul.mubr.f32.gmra.mxu0 %v1963
  %v2045 = vpop.f32.mrf.mxu0
  %v2046 = vadd.f32 0.0, %v2045
  %v2047 = vpop.f32.mrf.mxu0
  %2048 = vmatprep.mubr.f32.mxu0 0.0
  %2049 = vmatmul.mubr.f32.gmra.mxu0 %v1966
  %v2050 = vpop.f32.mrf.mxu0
  %v2051 = vadd.f32 0.0, %v2050
  %v2052 = vpop.f32.mrf.mxu0
  %2053 = vmatprep.mubr.f32.mxu0 0.0
  %2054 = vmatmul.mubr.f32.gmra.mxu0 %v1969
  %v2055 = vpop.f32.mrf.mxu0
  %v2056 = vadd.f32 0.0, %v2055
  %v2057 = vpop.f32.mrf.mxu0
  %2058 = vdwg.mxu0
  %v2059 = vadd.f32 %v1950, %v2041
  %v2060 = vadd.f32 %v1951, %v2046
  %v2061 = vadd.f32 %v1952, %v2051
  %v2062 = vadd.f32 %v1953, %v2056
  %s2063 = scalar_lea.vmem %s3, 192
  %v2064 = vld [vmem:[%s2063] sm:$0xff]
  %v2065 = vld [vmem:[%s2063 + $0x8] sm:$0xff]
  %v2066 = vld [vmem:[%s2063 + $0x10] sm:$0xff]
  %v2067 = vld [vmem:[%s2063 + $0x18] sm:$0x1]
  %v2069 = vsel %vm1425, %v1392, 0
  %v2072 = vsel %vm1425, %v1393, 0
  %v2075 = vsel %vm1425, %v1394, 0
  %v2078 = vsel %vm1425, %v1395, 0
  %v2081 = vsel %vm1438, %v2067, 0
  %2083 = vmatprep.subr.mxu0 0.0
  %2084 = vmatpush1.msra.mxu0 0.0
  %2085 = vmatprep.subr.mxu0 0.0
  %2086 = vmatpush1.msra.mxu0 0.0
  %2087 = vmatprep.subr.mxu0 0.0
  %2088 = vmatpush1.msra.mxu0 0.0
  %2089 = vmatprep.subr.mxu0 0.0
  %2090 = vmatpush1.msra.mxu0 0.0
  %2091 = vmatprep.subr.mxu0 0.0
  %2092 = vmatpush1.msra.mxu0 0.0
  %2093 = vmatprep.subr.mxu0 0.0
  %2094 = vmatpush1.msra.mxu0 0.0
  %2095 = vmatprep.subr.mxu0 0.0
  %2096 = vmatpush1.msra.mxu0 0.0
  %2097 = vmatprep.subr.mxu0 0.0
  %2098 = vmatpush1.msra.mxu0 0.0
  %2099 = vmatprep.subr.mxu0 0.0
  %2100 = vmatpush1.msra.mxu0 0.0
  %2101 = vmatprep.subr.mxu0 0.0
  %2102 = vmatpush1.msra.mxu0 0.0
  %2103 = vmatprep.subr.mxu0 0.0
  %2104 = vmatpush1.msra.mxu0 0.0
  %2105 = vmatprep.subr.mxu0 0.0
  %2106 = vmatpush1.msra.mxu0 0.0
  %2107 = vmatprep.subr.mxu0 0.0
  %2108 = vmatpush1.msra.mxu0 %v2081
  %2109 = vmatprep.subr.mxu0 0.0
  %2110 = vmatpush1.msra.mxu0 %v2066
  %2111 = vmatprep.subr.mxu0 0.0
  %2112 = vmatpush1.msra.mxu0 %v2065
  %2113 = vmatprep.subr.mxu0 0.0
  %2114 = vmatpush1.msra.mxu0 %v2064
  %2115 = vmatprep.subr.mxu0 0.0
  %2116 = vmatpush2.msra.mxu0 0.0
  %2117 = vmatprep.subr.mxu0 0.0
  %2118 = vmatpush2.msra.mxu0 0.0
  %2119 = vmatprep.subr.mxu0 0.0
  %2120 = vmatpush2.msra.mxu0 0.0
  %2121 = vmatprep.subr.mxu0 0.0
  %2122 = vmatpush2.msra.mxu0 0.0
  %2123 = vmatprep.subr.mxu0 0.0
  %2124 = vmatpush2.msra.mxu0 0.0
  %2125 = vmatprep.subr.mxu0 0.0
  %2126 = vmatpush2.msra.mxu0 0.0
  %2127 = vmatprep.subr.mxu0 0.0
  %2128 = vmatpush2.msra.mxu0 0.0
  %2129 = vmatprep.subr.mxu0 0.0
  %2130 = vmatpush2.msra.mxu0 0.0
  %2131 = vmatprep.subr.mxu0 0.0
  %2132 = vmatpush2.msra.mxu0 0.0
  %2133 = vmatprep.subr.mxu0 0.0
  %2134 = vmatpush2.msra.mxu0 0.0
  %2135 = vmatprep.subr.mxu0 0.0
  %2136 = vmatpush2.msra.mxu0 0.0
  %2137 = vmatprep.subr.mxu0 0.0
  %2138 = vmatpush2.msra.mxu0 0.0
  %2139 = vmatprep.subr.mxu0 0.0
  %2140 = vmatpush2.msra.mxu0 0.0
  %2141 = vmatprep.subr.mxu0 0.0
  %2142 = vmatpush2.msra.mxu0 0.0
  %2143 = vmatprep.subr.mxu0 0.0
  %2144 = vmatpush2.msra.mxu0 0.0
  %2145 = vmatprep.subr.mxu0 0.0
  %2146 = vmatpush2.msra.mxu0 0.0
  %2147 = vmatprep.mubr.f32.mxu0 0.0
  %2148 = vmatmul.mubr.f32.gmra.mxu0 %v2069
  %v2149 = vpop.f32.mrf.mxu0
  %v2150 = vadd.f32 0.0, %v2149
  %v2151 = vpop.f32.mrf.mxu0
  %2152 = vmatprep.mubr.f32.mxu0 0.0
  %2153 = vmatmul.mubr.f32.gmra.mxu0 %v2072
  %v2154 = vpop.f32.mrf.mxu0
  %v2155 = vadd.f32 0.0, %v2154
  %v2156 = vpop.f32.mrf.mxu0
  %2157 = vmatprep.mubr.f32.mxu0 0.0
  %2158 = vmatmul.mubr.f32.gmra.mxu0 %v2075
  %v2159 = vpop.f32.mrf.mxu0
  %v2160 = vadd.f32 0.0, %v2159
  %v2161 = vpop.f32.mrf.mxu0
  %2162 = vmatprep.mubr.f32.mxu0 0.0
  %2163 = vmatmul.mubr.f32.gmra.mxu0 %v2078
  %v2164 = vpop.f32.mrf.mxu0
  %v2165 = vadd.f32 0.0, %v2164
  %v2166 = vpop.f32.mrf.mxu0
  %2167 = vdwg.mxu0
  %v2168 = vadd.f32 %v2059, %v2150
  %v2169 = vadd.f32 %v2060, %v2155
  %v2170 = vadd.f32 %v2061, %v2160
  %v2171 = vadd.f32 %v2062, %v2165
  %s2172 = scalar_lea.vmem %s3, 224
  %v2173 = vld [vmem:[%s2172] sm:$0xff]
  %v2174 = vld [vmem:[%s2172 + $0x8] sm:$0xff]
  %v2175 = vld [vmem:[%s2172 + $0x10] sm:$0xff]
  %v2176 = vld [vmem:[%s2172 + $0x18] sm:$0x1]
  %v2178 = vsel %vm1425, %v1396, 0
  %v2181 = vsel %vm1425, %v1397, 0
  %v2184 = vsel %vm1425, %v1398, 0
  %v2187 = vsel %vm1425, %v1399, 0
  %v2190 = vsel %vm1438, %v2176, 0
  %2192 = vmatprep.subr.mxu0 0.0
  %2193 = vmatpush1.msra.mxu0 0.0
  %2194 = vmatprep.subr.mxu0 0.0
  %2195 = vmatpush1.msra.mxu0 0.0
  %2196 = vmatprep.subr.mxu0 0.0
  %2197 = vmatpush1.msra.mxu0 0.0
  %2198 = vmatprep.subr.mxu0 0.0
  %2199 = vmatpush1.msra.mxu0 0.0
  %2200 = vmatprep.subr.mxu0 0.0
  %2201 = vmatpush1.msra.mxu0 0.0
  %2202 = vmatprep.subr.mxu0 0.0
  %2203 = vmatpush1.msra.mxu0 0.0
  %2204 = vmatprep.subr.mxu0 0.0
  %2205 = vmatpush1.msra.mxu0 0.0
  %2206 = vmatprep.subr.mxu0 0.0
  %2207 = vmatpush1.msra.mxu0 0.0
  %2208 = vmatprep.subr.mxu0 0.0
  %2209 = vmatpush1.msra.mxu0 0.0
  %2210 = vmatprep.subr.mxu0 0.0
  %2211 = vmatpush1.msra.mxu0 0.0
  %2212 = vmatprep.subr.mxu0 0.0
  %2213 = vmatpush1.msra.mxu0 0.0
  %2214 = vmatprep.subr.mxu0 0.0
  %2215 = vmatpush1.msra.mxu0 0.0
  %2216 = vmatprep.subr.mxu0 0.0
  %2217 = vmatpush1.msra.mxu0 %v2190
  %2218 = vmatprep.subr.mxu0 0.0
  %2219 = vmatpush1.msra.mxu0 %v2175
  %2220 = vmatprep.subr.mxu0 0.0
  %2221 = vmatpush1.msra.mxu0 %v2174
  %2222 = vmatprep.subr.mxu0 0.0
  %2223 = vmatpush1.msra.mxu0 %v2173
  %2224 = vmatprep.subr.mxu0 0.0
  %2225 = vmatpush2.msra.mxu0 0.0
  %2226 = vmatprep.subr.mxu0 0.0
  %2227 = vmatpush2.msra.mxu0 0.0
  %2228 = vmatprep.subr.mxu0 0.0
  %2229 = vmatpush2.msra.mxu0 0.0
  %2230 = vmatprep.subr.mxu0 0.0
  %2231 = vmatpush2.msra.mxu0 0.0
  %2232 = vmatprep.subr.mxu0 0.0
  %2233 = vmatpush2.msra.mxu0 0.0
  %2234 = vmatprep.subr.mxu0 0.0
  %2235 = vmatpush2.msra.mxu0 0.0
  %2236 = vmatprep.subr.mxu0 0.0
  %2237 = vmatpush2.msra.mxu0 0.0
  %2238 = vmatprep.subr.mxu0 0.0
  %2239 = vmatpush2.msra.mxu0 0.0
  %2240 = vmatprep.subr.mxu0 0.0
  %2241 = vmatpush2.msra.mxu0 0.0
  %2242 = vmatprep.subr.mxu0 0.0
  %2243 = vmatpush2.msra.mxu0 0.0
  %2244 = vmatprep.subr.mxu0 0.0
  %2245 = vmatpush2.msra.mxu0 0.0
  %2246 = vmatprep.subr.mxu0 0.0
  %2247 = vmatpush2.msra.mxu0 0.0
  %2248 = vmatprep.subr.mxu0 0.0
  %2249 = vmatpush2.msra.mxu0 0.0
  %2250 = vmatprep.subr.mxu0 0.0
  %2251 = vmatpush2.msra.mxu0 0.0
  %2252 = vmatprep.subr.mxu0 0.0
  %2253 = vmatpush2.msra.mxu0 0.0
  %2254 = vmatprep.subr.mxu0 0.0
  %2255 = vmatpush2.msra.mxu0 0.0
  %2256 = vmatprep.mubr.f32.mxu0 0.0
  %2257 = vmatmul.mubr.f32.gmra.mxu0 %v2178
  %v2258 = vpop.f32.mrf.mxu0
  %v2259 = vadd.f32 0.0, %v2258
  %v2260 = vpop.f32.mrf.mxu0
  %2261 = vmatprep.mubr.f32.mxu0 0.0
  %2262 = vmatmul.mubr.f32.gmra.mxu0 %v2181
  %v2263 = vpop.f32.mrf.mxu0
  %v2264 = vadd.f32 0.0, %v2263
  %v2265 = vpop.f32.mrf.mxu0
  %2266 = vmatprep.mubr.f32.mxu0 0.0
  %2267 = vmatmul.mubr.f32.gmra.mxu0 %v2184
  %v2268 = vpop.f32.mrf.mxu0
  %v2269 = vadd.f32 0.0, %v2268
  %v2270 = vpop.f32.mrf.mxu0
  %2271 = vmatprep.mubr.f32.mxu0 0.0
  %2272 = vmatmul.mubr.f32.gmra.mxu0 %v2187
  %v2273 = vpop.f32.mrf.mxu0
  %v2274 = vadd.f32 0.0, %v2273
  %v2275 = vpop.f32.mrf.mxu0
  %2276 = vdwg.mxu0
  %v2277 = vadd.f32 %v2168, %v2259
  %v2278 = vadd.f32 %v2169, %v2264
  %v2279 = vadd.f32 %v2170, %v2269
  %v2280 = vadd.f32 %v2171, %v2274
  %s2281 = scalar_lea.vmem %s3, 256
  %v2282 = vld [vmem:[%s2281] sm:$0xff]
  %v2283 = vld [vmem:[%s2281 + $0x8] sm:$0xff]
  %v2284 = vld [vmem:[%s2281 + $0x10] sm:$0xff]
  %v2285 = vld [vmem:[%s2281 + $0x18] sm:$0x1]
  %v2287 = vsel %vm1425, %v1400, 0
  %v2290 = vsel %vm1425, %v1401, 0
  %v2293 = vsel %vm1425, %v1402, 0
  %v2296 = vsel %vm1425, %v1403, 0
  %v2299 = vsel %vm1438, %v2285, 0
  %2301 = vmatprep.subr.mxu0 0.0
  %2302 = vmatpush1.msra.mxu0 0.0
  %2303 = vmatprep.subr.mxu0 0.0
  %2304 = vmatpush1.msra.mxu0 0.0
  %2305 = vmatprep.subr.mxu0 0.0
  %2306 = vmatpush1.msra.mxu0 0.0
  %2307 = vmatprep.subr.mxu0 0.0
  %2308 = vmatpush1.msra.mxu0 0.0
  %2309 = vmatprep.subr.mxu0 0.0
  %2310 = vmatpush1.msra.mxu0 0.0
  %2311 = vmatprep.subr.mxu0 0.0
  %2312 = vmatpush1.msra.mxu0 0.0
  %2313 = vmatprep.subr.mxu0 0.0
  %2314 = vmatpush1.msra.mxu0 0.0
  %2315 = vmatprep.subr.mxu0 0.0
  %2316 = vmatpush1.msra.mxu0 0.0
  %2317 = vmatprep.subr.mxu0 0.0
  %2318 = vmatpush1.msra.mxu0 0.0
  %2319 = vmatprep.subr.mxu0 0.0
  %2320 = vmatpush1.msra.mxu0 0.0
  %2321 = vmatprep.subr.mxu0 0.0
  %2322 = vmatpush1.msra.mxu0 0.0
  %2323 = vmatprep.subr.mxu0 0.0
  %2324 = vmatpush1.msra.mxu0 0.0
  %2325 = vmatprep.subr.mxu0 0.0
  %2326 = vmatpush1.msra.mxu0 %v2299
  %2327 = vmatprep.subr.mxu0 0.0
  %2328 = vmatpush1.msra.mxu0 %v2284
  %2329 = vmatprep.subr.mxu0 0.0
  %2330 = vmatpush1.msra.mxu0 %v2283
  %2331 = vmatprep.subr.mxu0 0.0
  %2332 = vmatpush1.msra.mxu0 %v2282
  %2333 = vmatprep.subr.mxu0 0.0
  %2334 = vmatpush2.msra.mxu0 0.0
  %2335 = vmatprep.subr.mxu0 0.0
  %2336 = vmatpush2.msra.mxu0 0.0
  %2337 = vmatprep.subr.mxu0 0.0
  %2338 = vmatpush2.msra.mxu0 0.0
  %2339 = vmatprep.subr.mxu0 0.0
  %2340 = vmatpush2.msra.mxu0 0.0
  %2341 = vmatprep.subr.mxu0 0.0
  %2342 = vmatpush2.msra.mxu0 0.0
  %2343 = vmatprep.subr.mxu0 0.0
  %2344 = vmatpush2.msra.mxu0 0.0
  %2345 = vmatprep.subr.mxu0 0.0
  %2346 = vmatpush2.msra.mxu0 0.0
  %2347 = vmatprep.subr.mxu0 0.0
  %2348 = vmatpush2.msra.mxu0 0.0
  %2349 = vmatprep.subr.mxu0 0.0
  %2350 = vmatpush2.msra.mxu0 0.0
  %2351 = vmatprep.subr.mxu0 0.0
  %2352 = vmatpush2.msra.mxu0 0.0
  %2353 = vmatprep.subr.mxu0 0.0
  %2354 = vmatpush2.msra.mxu0 0.0
  %2355 = vmatprep.subr.mxu0 0.0
  %2356 = vmatpush2.msra.mxu0 0.0
  %2357 = vmatprep.subr.mxu0 0.0
  %2358 = vmatpush2.msra.mxu0 0.0
  %2359 = vmatprep.subr.mxu0 0.0
  %2360 = vmatpush2.msra.mxu0 0.0
  %2361 = vmatprep.subr.mxu0 0.0
  %2362 = vmatpush2.msra.mxu0 0.0
  %2363 = vmatprep.subr.mxu0 0.0
  %2364 = vmatpush2.msra.mxu0 0.0
  %2365 = vmatprep.mubr.f32.mxu0 0.0
  %2366 = vmatmul.mubr.f32.gmra.mxu0 %v2287
  %v2367 = vpop.f32.mrf.mxu0
  %v2368 = vadd.f32 0.0, %v2367
  %v2369 = vpop.f32.mrf.mxu0
  %2370 = vmatprep.mubr.f32.mxu0 0.0
  %2371 = vmatmul.mubr.f32.gmra.mxu0 %v2290
  %v2372 = vpop.f32.mrf.mxu0
  %v2373 = vadd.f32 0.0, %v2372
  %v2374 = vpop.f32.mrf.mxu0
  %2375 = vmatprep.mubr.f32.mxu0 0.0
  %2376 = vmatmul.mubr.f32.gmra.mxu0 %v2293
  %v2377 = vpop.f32.mrf.mxu0
  %v2378 = vadd.f32 0.0, %v2377
  %v2379 = vpop.f32.mrf.mxu0
  %2380 = vmatprep.mubr.f32.mxu0 0.0
  %2381 = vmatmul.mubr.f32.gmra.mxu0 %v2296
  %v2382 = vpop.f32.mrf.mxu0
  %v2383 = vadd.f32 0.0, %v2382
  %v2384 = vpop.f32.mrf.mxu0
  %2385 = vdwg.mxu0
  %v2386 = vadd.f32 %v2277, %v2368
  %v2387 = vadd.f32 %v2278, %v2373
  %v2388 = vadd.f32 %v2279, %v2378
  %v2389 = vadd.f32 %v2280, %v2383
  %s2390 = scalar_lea.vmem %s3, 288
  %v2391 = vld [vmem:[%s2390] sm:$0xff]
  %v2392 = vld [vmem:[%s2390 + $0x8] sm:$0xff]
  %v2393 = vld [vmem:[%s2390 + $0x10] sm:$0xff]
  %v2394 = vld [vmem:[%s2390 + $0x18] sm:$0x1]
  %v2396 = vsel %vm1425, %v1404, 0
  %v2399 = vsel %vm1425, %v1405, 0
  %v2402 = vsel %vm1425, %v1406, 0
  %v2405 = vsel %vm1425, %v1407, 0
  %v2408 = vsel %vm1438, %v2394, 0
  %2410 = vmatprep.subr.mxu0 0.0
  %2411 = vmatpush1.msra.mxu0 0.0
  %2412 = vmatprep.subr.mxu0 0.0
  %2413 = vmatpush1.msra.mxu0 0.0
  %2414 = vmatprep.subr.mxu0 0.0
  %2415 = vmatpush1.msra.mxu0 0.0
  %2416 = vmatprep.subr.mxu0 0.0
  %2417 = vmatpush1.msra.mxu0 0.0
  %2418 = vmatprep.subr.mxu0 0.0
  %2419 = vmatpush1.msra.mxu0 0.0
  %2420 = vmatprep.subr.mxu0 0.0
  %2421 = vmatpush1.msra.mxu0 0.0
  %2422 = vmatprep.subr.mxu0 0.0
  %2423 = vmatpush1.msra.mxu0 0.0
  %2424 = vmatprep.subr.mxu0 0.0
  %2425 = vmatpush1.msra.mxu0 0.0
  %2426 = vmatprep.subr.mxu0 0.0
  %2427 = vmatpush1.msra.mxu0 0.0
  %2428 = vmatprep.subr.mxu0 0.0
  %2429 = vmatpush1.msra.mxu0 0.0
  %2430 = vmatprep.subr.mxu0 0.0
  %2431 = vmatpush1.msra.mxu0 0.0
  %2432 = vmatprep.subr.mxu0 0.0
  %2433 = vmatpush1.msra.mxu0 0.0
  %2434 = vmatprep.subr.mxu0 0.0
  %2435 = vmatpush1.msra.mxu0 %v2408
  %2436 = vmatprep.subr.mxu0 0.0
  %2437 = vmatpush1.msra.mxu0 %v2393
  %2438 = vmatprep.subr.mxu0 0.0
  %2439 = vmatpush1.msra.mxu0 %v2392
  %2440 = vmatprep.subr.mxu0 0.0
  %2441 = vmatpush1.msra.mxu0 %v2391
  %2442 = vmatprep.subr.mxu0 0.0
  %2443 = vmatpush2.msra.mxu0 0.0
  %2444 = vmatprep.subr.mxu0 0.0
  %2445 = vmatpush2.msra.mxu0 0.0
  %2446 = vmatprep.subr.mxu0 0.0
  %2447 = vmatpush2.msra.mxu0 0.0
  %2448 = vmatprep.subr.mxu0 0.0
  %2449 = vmatpush2.msra.mxu0 0.0
  %2450 = vmatprep.subr.mxu0 0.0
  %2451 = vmatpush2.msra.mxu0 0.0
  %2452 = vmatprep.subr.mxu0 0.0
  %2453 = vmatpush2.msra.mxu0 0.0
  %2454 = vmatprep.subr.mxu0 0.0
  %2455 = vmatpush2.msra.mxu0 0.0
  %2456 = vmatprep.subr.mxu0 0.0
  %2457 = vmatpush2.msra.mxu0 0.0
  %2458 = vmatprep.subr.mxu0 0.0
  %2459 = vmatpush2.msra.mxu0 0.0
  %2460 = vmatprep.subr.mxu0 0.0
  %2461 = vmatpush2.msra.mxu0 0.0
  %2462 = vmatprep.subr.mxu0 0.0
  %2463 = vmatpush2.msra.mxu0 0.0
  %2464 = vmatprep.subr.mxu0 0.0
  %2465 = vmatpush2.msra.mxu0 0.0
  %2466 = vmatprep.subr.mxu0 0.0
  %2467 = vmatpush2.msra.mxu0 0.0
  %2468 = vmatprep.subr.mxu0 0.0
  %2469 = vmatpush2.msra.mxu0 0.0
  %2470 = vmatprep.subr.mxu0 0.0
  %2471 = vmatpush2.msra.mxu0 0.0
  %2472 = vmatprep.subr.mxu0 0.0
  %2473 = vmatpush2.msra.mxu0 0.0
  %2474 = vmatprep.mubr.f32.mxu0 0.0
  %2475 = vmatmul.mubr.f32.gmra.mxu0 %v2396
  %v2476 = vpop.f32.mrf.mxu0
  %v2477 = vadd.f32 0.0, %v2476
  %v2478 = vpop.f32.mrf.mxu0
  %2479 = vmatprep.mubr.f32.mxu0 0.0
  %2480 = vmatmul.mubr.f32.gmra.mxu0 %v2399
  %v2481 = vpop.f32.mrf.mxu0
  %v2482 = vadd.f32 0.0, %v2481
  %v2483 = vpop.f32.mrf.mxu0
  %2484 = vmatprep.mubr.f32.mxu0 0.0
  %2485 = vmatmul.mubr.f32.gmra.mxu0 %v2402
  %v2486 = vpop.f32.mrf.mxu0
  %v2487 = vadd.f32 0.0, %v2486
  %v2488 = vpop.f32.mrf.mxu0
  %2489 = vmatprep.mubr.f32.mxu0 0.0
  %2490 = vmatmul.mubr.f32.gmra.mxu0 %v2405
  %v2491 = vpop.f32.mrf.mxu0
  %v2492 = vadd.f32 0.0, %v2491
  %v2493 = vpop.f32.mrf.mxu0
  %2494 = vdwg.mxu0
  %v2495 = vadd.f32 %v2386, %v2477
  %v2496 = vadd.f32 %v2387, %v2482
  %v2497 = vadd.f32 %v2388, %v2487
  %v2498 = vadd.f32 %v2389, %v2492
  %s2499 = scalar_lea.vmem %s3, 320
  %v2500 = vld [vmem:[%s2499] sm:$0xff]
  %v2501 = vld [vmem:[%s2499 + $0x8] sm:$0xff]
  %v2502 = vld [vmem:[%s2499 + $0x10] sm:$0xff]
  %v2503 = vld [vmem:[%s2499 + $0x18] sm:$0x1]
  %v2505 = vsel %vm1425, %v1408, 0
  %v2508 = vsel %vm1425, %v1409, 0
  %v2511 = vsel %vm1425, %v1410, 0
  %v2514 = vsel %vm1425, %v1411, 0
  %v2517 = vsel %vm1438, %v2503, 0
  %2519 = vmatprep.subr.mxu0 0.0
  %2520 = vmatpush1.msra.mxu0 0.0
  %2521 = vmatprep.subr.mxu0 0.0
  %2522 = vmatpush1.msra.mxu0 0.0
  %2523 = vmatprep.subr.mxu0 0.0
  %2524 = vmatpush1.msra.mxu0 0.0
  %2525 = vmatprep.subr.mxu0 0.0
  %2526 = vmatpush1.msra.mxu0 0.0
  %2527 = vmatprep.subr.mxu0 0.0
  %2528 = vmatpush1.msra.mxu0 0.0
  %2529 = vmatprep.subr.mxu0 0.0
  %2530 = vmatpush1.msra.mxu0 0.0
  %2531 = vmatprep.subr.mxu0 0.0
  %2532 = vmatpush1.msra.mxu0 0.0
  %2533 = vmatprep.subr.mxu0 0.0
  %2534 = vmatpush1.msra.mxu0 0.0
  %2535 = vmatprep.subr.mxu0 0.0
  %2536 = vmatpush1.msra.mxu0 0.0
  %2537 = vmatprep.subr.mxu0 0.0
  %2538 = vmatpush1.msra.mxu0 0.0
  %2539 = vmatprep.subr.mxu0 0.0
  %2540 = vmatpush1.msra.mxu0 0.0
  %2541 = vmatprep.subr.mxu0 0.0
  %2542 = vmatpush1.msra.mxu0 0.0
  %2543 = vmatprep.subr.mxu0 0.0
  %2544 = vmatpush1.msra.mxu0 %v2517
  %2545 = vmatprep.subr.mxu0 0.0
  %2546 = vmatpush1.msra.mxu0 %v2502
  %2547 = vmatprep.subr.mxu0 0.0
  %2548 = vmatpush1.msra.mxu0 %v2501
  %2549 = vmatprep.subr.mxu0 0.0
  %2550 = vmatpush1.msra.mxu0 %v2500
  %2551 = vmatprep.subr.mxu0 0.0
  %2552 = vmatpush2.msra.mxu0 0.0
  %2553 = vmatprep.subr.mxu0 0.0
  %2554 = vmatpush2.msra.mxu0 0.0
  %2555 = vmatprep.subr.mxu0 0.0
  %2556 = vmatpush2.msra.mxu0 0.0
  %2557 = vmatprep.subr.mxu0 0.0
  %2558 = vmatpush2.msra.mxu0 0.0
  %2559 = vmatprep.subr.mxu0 0.0
  %2560 = vmatpush2.msra.mxu0 0.0
  %2561 = vmatprep.subr.mxu0 0.0
  %2562 = vmatpush2.msra.mxu0 0.0
  %2563 = vmatprep.subr.mxu0 0.0
  %2564 = vmatpush2.msra.mxu0 0.0
  %2565 = vmatprep.subr.mxu0 0.0
  %2566 = vmatpush2.msra.mxu0 0.0
  %2567 = vmatprep.subr.mxu0 0.0
  %2568 = vmatpush2.msra.mxu0 0.0
  %2569 = vmatprep.subr.mxu0 0.0
  %2570 = vmatpush2.msra.mxu0 0.0
  %2571 = vmatprep.subr.mxu0 0.0
  %2572 = vmatpush2.msra.mxu0 0.0
  %2573 = vmatprep.subr.mxu0 0.0
  %2574 = vmatpush2.msra.mxu0 0.0
  %2575 = vmatprep.subr.mxu0 0.0
  %2576 = vmatpush2.msra.mxu0 0.0
  %2577 = vmatprep.subr.mxu0 0.0
  %2578 = vmatpush2.msra.mxu0 0.0
  %2579 = vmatprep.subr.mxu0 0.0
  %2580 = vmatpush2.msra.mxu0 0.0
  %2581 = vmatprep.subr.mxu0 0.0
  %2582 = vmatpush2.msra.mxu0 0.0
  %2583 = vmatprep.mubr.f32.mxu0 0.0
  %2584 = vmatmul.mubr.f32.gmra.mxu0 %v2505
  %v2585 = vpop.f32.mrf.mxu0
  %v2586 = vadd.f32 0.0, %v2585
  %v2587 = vpop.f32.mrf.mxu0
  %2588 = vmatprep.mubr.f32.mxu0 0.0
  %2589 = vmatmul.mubr.f32.gmra.mxu0 %v2508
  %v2590 = vpop.f32.mrf.mxu0
  %v2591 = vadd.f32 0.0, %v2590
  %v2592 = vpop.f32.mrf.mxu0
  %2593 = vmatprep.mubr.f32.mxu0 0.0
  %2594 = vmatmul.mubr.f32.gmra.mxu0 %v2511
  %v2595 = vpop.f32.mrf.mxu0
  %v2596 = vadd.f32 0.0, %v2595
  %v2597 = vpop.f32.mrf.mxu0
  %2598 = vmatprep.mubr.f32.mxu0 0.0
  %2599 = vmatmul.mubr.f32.gmra.mxu0 %v2514
  %v2600 = vpop.f32.mrf.mxu0
  %v2601 = vadd.f32 0.0, %v2600
  %v2602 = vpop.f32.mrf.mxu0
  %2603 = vdwg.mxu0
  %v2604 = vadd.f32 %v2495, %v2586
  %v2605 = vadd.f32 %v2496, %v2591
  %v2606 = vadd.f32 %v2497, %v2596
  %v2607 = vadd.f32 %v2498, %v2601
  %s2608 = scalar_lea.vmem %s3, 352
  %v2609 = vld [vmem:[%s2608] sm:$0xff]
  %v2610 = vld [vmem:[%s2608 + $0x8] sm:$0xff]
  %v2611 = vld [vmem:[%s2608 + $0x10] sm:$0xff]
  %v2612 = vld [vmem:[%s2608 + $0x18] sm:$0x1]
  %v2614 = vsel %vm1425, %v1412, 0
  %v2617 = vsel %vm1425, %v1413, 0
  %v2620 = vsel %vm1425, %v1414, 0
  %v2623 = vsel %vm1425, %v1415, 0
  %v2626 = vsel %vm1438, %v2612, 0
  %2628 = vmatprep.subr.mxu0 0.0
  %2629 = vmatpush1.msra.mxu0 0.0
  %2630 = vmatprep.subr.mxu0 0.0
  %2631 = vmatpush1.msra.mxu0 0.0
  %2632 = vmatprep.subr.mxu0 0.0
  %2633 = vmatpush1.msra.mxu0 0.0
  %2634 = vmatprep.subr.mxu0 0.0
  %2635 = vmatpush1.msra.mxu0 0.0
  %2636 = vmatprep.subr.mxu0 0.0
  %2637 = vmatpush1.msra.mxu0 0.0
  %2638 = vmatprep.subr.mxu0 0.0
  %2639 = vmatpush1.msra.mxu0 0.0
  %2640 = vmatprep.subr.mxu0 0.0
  %2641 = vmatpush1.msra.mxu0 0.0
  %2642 = vmatprep.subr.mxu0 0.0
  %2643 = vmatpush1.msra.mxu0 0.0
  %2644 = vmatprep.subr.mxu0 0.0
  %2645 = vmatpush1.msra.mxu0 0.0
  %2646 = vmatprep.subr.mxu0 0.0
  %2647 = vmatpush1.msra.mxu0 0.0
  %2648 = vmatprep.subr.mxu0 0.0
  %2649 = vmatpush1.msra.mxu0 0.0
  %2650 = vmatprep.subr.mxu0 0.0
  %2651 = vmatpush1.msra.mxu0 0.0
  %2652 = vmatprep.subr.mxu0 0.0
  %2653 = vmatpush1.msra.mxu0 %v2626
  %2654 = vmatprep.subr.mxu0 0.0
  %2655 = vmatpush1.msra.mxu0 %v2611
  %2656 = vmatprep.subr.mxu0 0.0
  %2657 = vmatpush1.msra.mxu0 %v2610
  %2658 = vmatprep.subr.mxu0 0.0
  %2659 = vmatpush1.msra.mxu0 %v2609
  %2660 = vmatprep.subr.mxu0 0.0
  %2661 = vmatpush2.msra.mxu0 0.0
  %2662 = vmatprep.subr.mxu0 0.0
  %2663 = vmatpush2.msra.mxu0 0.0
  %2664 = vmatprep.subr.mxu0 0.0
  %2665 = vmatpush2.msra.mxu0 0.0
  %2666 = vmatprep.subr.mxu0 0.0
  %2667 = vmatpush2.msra.mxu0 0.0
  %2668 = vmatprep.subr.mxu0 0.0
  %2669 = vmatpush2.msra.mxu0 0.0
  %2670 = vmatprep.subr.mxu0 0.0
  %2671 = vmatpush2.msra.mxu0 0.0
  %2672 = vmatprep.subr.mxu0 0.0
  %2673 = vmatpush2.msra.mxu0 0.0
  %2674 = vmatprep.subr.mxu0 0.0
  %2675 = vmatpush2.msra.mxu0 0.0
  %2676 = vmatprep.subr.mxu0 0.0
  %2677 = vmatpush2.msra.mxu0 0.0
  %2678 = vmatprep.subr.mxu0 0.0
  %2679 = vmatpush2.msra.mxu0 0.0
  %2680 = vmatprep.subr.mxu0 0.0
  %2681 = vmatpush2.msra.mxu0 0.0
  %2682 = vmatprep.subr.mxu0 0.0
  %2683 = vmatpush2.msra.mxu0 0.0
  %2684 = vmatprep.subr.mxu0 0.0
  %2685 = vmatpush2.msra.mxu0 0.0
  %2686 = vmatprep.subr.mxu0 0.0
  %2687 = vmatpush2.msra.mxu0 0.0
  %2688 = vmatprep.subr.mxu0 0.0
  %2689 = vmatpush2.msra.mxu0 0.0
  %2690 = vmatprep.subr.mxu0 0.0
  %2691 = vmatpush2.msra.mxu0 0.0
  %2692 = vmatprep.mubr.f32.mxu0 0.0
  %2693 = vmatmul.mubr.f32.gmra.mxu0 %v2614
  %v2694 = vpop.f32.mrf.mxu0
  %v2695 = vadd.f32 0.0, %v2694
  %v2696 = vpop.f32.mrf.mxu0
  %2697 = vmatprep.mubr.f32.mxu0 0.0
  %2698 = vmatmul.mubr.f32.gmra.mxu0 %v2617
  %v2699 = vpop.f32.mrf.mxu0
  %v2700 = vadd.f32 0.0, %v2699
  %v2701 = vpop.f32.mrf.mxu0
  %2702 = vmatprep.mubr.f32.mxu0 0.0
  %2703 = vmatmul.mubr.f32.gmra.mxu0 %v2620
  %v2704 = vpop.f32.mrf.mxu0
  %v2705 = vadd.f32 0.0, %v2704
  %v2706 = vpop.f32.mrf.mxu0
  %2707 = vmatprep.mubr.f32.mxu0 0.0
  %2708 = vmatmul.mubr.f32.gmra.mxu0 %v2623
  %v2709 = vpop.f32.mrf.mxu0
  %v2710 = vadd.f32 0.0, %v2709
  %v2711 = vpop.f32.mrf.mxu0
  %2712 = vdwg.mxu0
  %v2713 = vadd.f32 %v2604, %v2695
  %v2714 = vadd.f32 %v2605, %v2700
  %v2715 = vadd.f32 %v2606, %v2705
  %v2716 = vadd.f32 %v2607, %v2710
  %v2717 = vld [vmem:[%s4] sm:$0x1]
  %v2719 = vlaneseq
  %v2720 = vshrl.u32 %v2719, 7
  %v2721 = vsub.s32 0, %v2720
  %v2722 = vrot.slane %v2717, %v2721
  %v2724 = vadd.f32 %v2713, %v2722
  %v2725 = vadd.f32 %v2714, %v2722
  %v2726 = vadd.f32 %v2715, %v2722
  %v2727 = vadd.f32 %v2716, %v2722
  %vm2728 = vcmp.gt.f32.partialorder %v2724, 0.0
  %vm2729 = vcmp.gt.f32.partialorder %v2725, 0.0
  %vm2730 = vcmp.gt.f32.partialorder %v2726, 0.0
  %vm2731 = vcmp.gt.f32.partialorder %v2727, 0.0
  %v2732 = vmin.f32 %v2724, 0.0
  %v2733 = vmin.f32 %v2725, 0.0
  %v2734 = vmin.f32 %v2726, 0.0
  %v2735 = vmin.f32 %v2727, 0.0
  %v2736 = vmul.f32 %v2732, 1.442695
  %v2737 = vpow.pop %v2736
  %v2738 = vmul.f32 %v2733, 1.442695
  %v2739 = vpow.pop %v2738
  %v2740 = vmul.f32 %v2734, 1.442695
  %v2741 = vpow.pop %v2740
  %v2742 = vmul.f32 %v2735, 1.442695
  %v2743 = vpow.pop %v2742
  %v2744 = vsub.f32 %v2737, 1.0
  %v2745 = vsub.f32 %v2739, 1.0
  %v2746 = vsub.f32 %v2741, 1.0
  %v2747 = vsub.f32 %v2743, 1.0
  %v2748 = vsel %vm2728, %v2724, %v2744
  %v2749 = vsel %vm2729, %v2725, %v2745
  %v2750 = vsel %vm2730, %v2726, %v2746
  %v2751 = vsel %vm2731, %v2727, %v2747
  %v2752 = vld [vmem:[%s5] sm:$0xff]
  %v2753 = vld [vmem:[%s5 + $0x8] sm:$0xff]
  %v2754 = vld [vmem:[%s5 + $0x10] sm:$0xff]
  %v2755 = vld [vmem:[%s5 + $0x18] sm:$0xff]
  %v2756 = vld [vmem:[%s5 + $0x20] sm:$0xff]
  %v2757 = vld [vmem:[%s5 + $0x28] sm:$0xff]
  %v2758 = vld [vmem:[%s5 + $0x30] sm:$0x3]
  %v2759 = vld [vmem:[%s6] sm:$0x1]
  %v2761 = vlaneseq
  %v2762 = vshrl.u32 %v2761, 7
  %v2763 = vsub.s32 0, %v2762
  %v2764 = vrot.slane %v2759, %v2763
  %vm2766 = vcmask 408576
  %v2768 = vsel %vm2766, %v2748, 0
  %v2771 = vsel %vm2766, %v2749, 0
  %v2774 = vsel %vm2766, %v2750, 0
  %v2777 = vsel %vm2766, %v2751, 0
  %vm2779 = vcmask 1041408
  %v2781 = vsel %vm2779, %v2758, 0
  %2783 = vmatprep.subr.mxu0 0.0
  %2784 = vmatpush1.msra.mxu0 0.0
  %2785 = vmatprep.subr.mxu0 0.0
  %2786 = vmatpush1.msra.mxu0 0.0
  %2787 = vmatprep.subr.mxu0 0.0
  %2788 = vmatpush1.msra.mxu0 0.0
  %2789 = vmatprep.subr.mxu0 0.0
  %2790 = vmatpush1.msra.mxu0 0.0
  %2791 = vmatprep.subr.mxu0 0.0
  %2792 = vmatpush1.msra.mxu0 0.0
  %2793 = vmatprep.subr.mxu0 0.0
  %2794 = vmatpush1.msra.mxu0 0.0
  %2795 = vmatprep.subr.mxu0 0.0
  %2796 = vmatpush1.msra.mxu0 0.0
  %2797 = vmatprep.subr.mxu0 0.0
  %2798 = vmatpush1.msra.mxu0 0.0
  %2799 = vmatprep.subr.mxu0 0.0
  %2800 = vmatpush1.msra.mxu0 0.0
  %2801 = vmatprep.subr.mxu0 0.0
  %2802 = vmatpush1.msra.mxu0 %v2781
  %2803 = vmatprep.subr.mxu0 0.0
  %2804 = vmatpush1.msra.mxu0 %v2757
  %2805 = vmatprep.subr.mxu0 0.0
  %2806 = vmatpush1.msra.mxu0 %v2756
  %2807 = vmatprep.subr.mxu0 0.0
  %2808 = vmatpush1.msra.mxu0 %v2755
  %2809 = vmatprep.subr.mxu0 0.0
  %2810 = vmatpush1.msra.mxu0 %v2754
  %2811 = vmatprep.subr.mxu0 0.0
  %2812 = vmatpush1.msra.mxu0 %v2753
  %2813 = vmatprep.subr.mxu0 0.0
  %2814 = vmatpush1.msra.mxu0 %v2752
  %2815 = vmatprep.subr.mxu0 0.0
  %2816 = vmatpush2.msra.mxu0 0.0
  %2817 = vmatprep.subr.mxu0 0.0
  %2818 = vmatpush2.msra.mxu0 0.0
  %2819 = vmatprep.subr.mxu0 0.0
  %2820 = vmatpush2.msra.mxu0 0.0
  %2821 = vmatprep.subr.mxu0 0.0
  %2822 = vmatpush2.msra.mxu0 0.0
  %2823 = vmatprep.subr.mxu0 0.0
  %2824 = vmatpush2.msra.mxu0 0.0
  %2825 = vmatprep.subr.mxu0 0.0
  %2826 = vmatpush2.msra.mxu0 0.0
  %2827 = vmatprep.subr.mxu0 0.0
  %2828 = vmatpush2.msra.mxu0 0.0
  %2829 = vmatprep.subr.mxu0 0.0
  %2830 = vmatpush2.msra.mxu0 0.0
  %2831 = vmatprep.subr.mxu0 0.0
  %2832 = vmatpush2.msra.mxu0 0.0
  %2833 = vmatprep.subr.mxu0 0.0
  %2834 = vmatpush2.msra.mxu0 0.0
  %2835 = vmatprep.subr.mxu0 0.0
  %2836 = vmatpush2.msra.mxu0 0.0
  %2837 = vmatprep.subr.mxu0 0.0
  %2838 = vmatpush2.msra.mxu0 0.0
  %2839 = vmatprep.subr.mxu0 0.0
  %2840 = vmatpush2.msra.mxu0 0.0
  %2841 = vmatprep.subr.mxu0 0.0
  %2842 = vmatpush2.msra.mxu0 0.0
  %2843 = vmatprep.subr.mxu0 0.0
  %2844 = vmatpush2.msra.mxu0 0.0
  %2845 = vmatprep.subr.mxu0 0.0
  %2846 = vmatpush2.msra.mxu0 0.0
  %2847 = vmatprep.mubr.f32.mxu0 0.0
  %2848 = vmatmul.mubr.f32.gmra.mxu0 %v2768
  %v2849 = vpop.f32.mrf.mxu0
  %v2850 = vadd.f32 %v2764, %v2849
  %v2851 = vpop.f32.mrf.mxu0
  %2852 = vmatprep.mubr.f32.mxu0 0.0
  %2853 = vmatmul.mubr.f32.gmra.mxu0 %v2771
  %v2854 = vpop.f32.mrf.mxu0
  %v2855 = vadd.f32 %v2764, %v2854
  %v2856 = vpop.f32.mrf.mxu0
  %2857 = vmatprep.mubr.f32.mxu0 0.0
  %2858 = vmatmul.mubr.f32.gmra.mxu0 %v2774
  %v2859 = vpop.f32.mrf.mxu0
  %v2860 = vadd.f32 %v2764, %v2859
  %v2861 = vpop.f32.mrf.mxu0
  %2862 = vmatprep.mubr.f32.mxu0 0.0
  %2863 = vmatmul.mubr.f32.gmra.mxu0 %v2777
  %v2864 = vpop.f32.mrf.mxu0
  %v2865 = vadd.f32 %v2764, %v2864
  %v2866 = vpop.f32.mrf.mxu0
  %2867 = vdwg.mxu0
  %vm2868 = vcmp.gt.f32.partialorder %v2850, 0.0
  %vm2869 = vcmp.gt.f32.partialorder %v2855, 0.0
  %vm2870 = vcmp.gt.f32.partialorder %v2860, 0.0
  %vm2871 = vcmp.gt.f32.partialorder %v2865, 0.0
  %v2872 = vmin.f32 %v2850, 0.0
  %v2873 = vmin.f32 %v2855, 0.0
  %v2874 = vmin.f32 %v2860, 0.0
  %v2875 = vmin.f32 %v2865, 0.0
  %v2876 = vmul.f32 %v2872, 1.442695
  %v2877 = vpow.pop %v2876
  %v2878 = vmul.f32 %v2873, 1.442695
  %v2879 = vpow.pop %v2878
  %v2880 = vmul.f32 %v2874, 1.442695
  %v2881 = vpow.pop %v2880
  %v2882 = vmul.f32 %v2875, 1.442695
  %v2883 = vpow.pop %v2882
  %v2884 = vsub.f32 %v2877, 1.0
  %v2885 = vsub.f32 %v2879, 1.0
  %v2886 = vsub.f32 %v2881, 1.0
  %v2887 = vsub.f32 %v2883, 1.0
  %v2888 = vsel %vm2868, %v2850, %v2884
  %v2889 = vsel %vm2869, %v2855, %v2885
  %v2890 = vsel %vm2870, %v2860, %v2886
  %v2891 = vsel %vm2871, %v2865, %v2887
  %vm2892 = vcmask 15360
  %2893 = vst.msk [vmem:[%s7] sm:$0xff] %vm2892, %v2888
  %2894 = vst.msk [vmem:[%s7 + $0x8] sm:$0xff] %vm2892, %v2889
  %2895 = vst.msk [vmem:[%s7 + $0x10] sm:$0xff] %vm2892, %v2890
  %2896 = vst.msk [vmem:[%s7 + $0x18] sm:$0xff] %vm2892, %v2891
  // Predicated region
  $region30: #{encoder_forward.1} parent=0 // pred_check
    _
  $region31: #{encoder_forward.1} parent=0 // pred_check_branch
    %2898 = sbr.rel (0) target = $region33
  $region32: #{encoder_forward.1} parent=0 // pred_region
    _
  $region33: #{encoder_forward.1} parent=0 // pred_fallthru
    _
  // Predicated region
  $region34: #{encoder_forward.1} parent=0 // pred_check
    _
  $region35: #{encoder_forward.1} parent=0 // pred_check_branch
    %2900 = sbr.rel (0) target = $region37
  $region36: #{encoder_forward.1} parent=0 // pred_region
    _
  $region37: #{encoder_forward.1} parent=0 // pred_fallthru
    _

</llo_original>
